<compile_context>
chip_gen: v5e
topology: v5e:2x2
jax: 0.10.0
libtpu: 0.0.40
codegen_flags: <defaults>
</compile_context>

<pallas_src>
import jax
import jax.numpy as jnp
from jax import lax
from jax.experimental import pallas as pl
from jax.experimental.pallas import tpu as pltpu

EPS = 1e-5


def _add_layernorm_kernel(x_ref, y_ref, gb_ref, o_ref):
    # Fused elementwise add (VPU) + row-wise LayerNorm over the last (lane) axis.
    s = x_ref[...].astype(jnp.float32) + y_ref[...].astype(jnp.float32)
    c = s.shape[-1]
    inv_c = jnp.float32(1.0 / c)

    # Two-pass (centered) mean/variance for parity with torch.nn.LayerNorm.
    mean = jnp.sum(s, axis=-1, keepdims=True) * inv_c
    d = s - mean
    var = jnp.sum(d * d, axis=-1, keepdims=True) * inv_c
    inv = lax.rsqrt(var + EPS)

    gamma = gb_ref[0:1, :].astype(jnp.float32)
    beta = gb_ref[1:2, :].astype(jnp.float32)
    o_ref[...] = (d * inv * gamma + beta).astype(o_ref.dtype)


def _num_tensorcores() -> int:
    """Best-effort TensorCore-per-chip count (2 on v7x, 1 on v5e/v6e).
    Falls back to 1 if detection is unavailable (e.g. mock/CPU tracing)."""
    # Preferred: Pallas TPU info query.
    try:
        info = pltpu.get_tpu_info()
        for attr in ("num_cores", "num_tensor_cores", "tensor_cores_per_chip",
                     "cores_per_chip", "num_tensorcores"):
            v = getattr(info, attr, None)
            if isinstance(v, int) and v > 0:
                return v
    except Exception:
        pass
    # Fallbacks: device attributes / device_kind.
    try:
        d = jax.devices()[0]
        v = getattr(d, "num_cores", None)
        if isinstance(v, int) and v > 0:
            return v
        kind = str(getattr(d, "device_kind", "")).lower()
        if "v7" in kind or "7x" in kind:
            return 2
    except Exception:
        pass
    return 1


def add_layernorm(x, y, gamma, beta):
    """x, y: (B, H, W, C); gamma, beta: (C,). Returns LayerNorm(x + y) over C."""
    assert x.shape == y.shape
    B, H, W, C = x.shape
    N = B * H * W
    x2 = x.reshape(N, C)
    y2 = y.reshape(N, C)
    # Single merged parameter operand: row 0 = gamma, row 1 = beta.
    gb = jnp.concatenate([gamma.reshape(1, C), beta.reshape(1, C)], axis=0)

    # Row-tile choice: split rows across TensorCores on multi-core chips (v7x),
    # single full-extent block otherwise (v5e / v6e).
    ncores = _num_tensorcores()
    if ncores >= 2 and N > 8:
        half = -(-N // ncores)                  # ceil(N / ncores)
        tn = max(8, ((half + 7) // 8) * 8)      # round up to sublane multiple (8)
    else:
        tn = N
    grid = (pl.cdiv(N, tn),)

    if grid[0] >= 2 and ncores >= 2:
        # Shard the row-tile axis across TensorCores.
        dim_sem = (getattr(pltpu, "CORE_PARALLEL", "parallel"),)
    else:
        dim_sem = ("arbitrary",)

    itemsize = jnp.dtype(x.dtype).itemsize
    cost = pl.CostEstimate(
        flops=8 * N * C,                                   # add + 2 reductions + normalize/affine
        transcendentals=N,                                 # one rsqrt per row
        bytes_accessed=3 * N * C * itemsize + 2 * C * jnp.dtype(gamma.dtype).itemsize,
    )

    out2 = pl.pallas_call(
        _add_layernorm_kernel,
        out_shape=jax.ShapeDtypeStruct((N, C), x.dtype),
        grid_spec=pl.GridSpec(
            grid=grid,
            in_specs=[
                pl.BlockSpec((tn, C), lambda i: (i, 0)),
                pl.BlockSpec((tn, C), lambda i: (i, 0)),
                pl.BlockSpec((2, C), lambda i: (0, 0)),
            ],
            out_specs=pl.BlockSpec((tn, C), lambda i: (i, 0)),
        ),
        compiler_params=pltpu.CompilerParams(dimension_semantics=dim_sem),
        cost_estimate=cost,
    )(x2, y2, gb)
    return out2.reshape(B, H, W, C)


def reference(x, y, gamma, beta):
    s = x + y
    mean = jnp.mean(s, axis=-1, keepdims=True)
    var = jnp.mean((s - mean) ** 2, axis=-1, keepdims=True)
    return (s - mean) / jnp.sqrt(var + EPS) * gamma + beta


if __name__ == "__main__":
    key = jax.random.PRNGKey(0)
    k1, k2 = jax.random.split(key)
    shape = (1, 14, 14, 512)  # matches the PyTorch module's inputs
    x410 = jax.random.normal(k1, shape, dtype=jnp.float32)
    x424 = jax.random.normal(k2, shape, dtype=jnp.float32)

    # PyTorch LayerNorm default init: weight=1, bias=0.
    gamma = jnp.ones((512,), dtype=jnp.float32)
    beta = jnp.zeros((512,), dtype=jnp.float32)

    out = add_layernorm(x410, x424, gamma, beta)
    out = jax.block_until_ready(out)

    ref = reference(x410, x424, gamma, beta)
    assert out.shape == shape
    assert jnp.allclose(out, ref, atol=1e-4, rtol=1e-4), "mismatch vs reference"
    print("KERNEL_OK")
</pallas_src>

<mosaic_0001>
module attributes {stable_mosaic.version = 11 : i64} {
  func.func @_add_layernorm_kernel(%arg0: i32, %arg1: memref<196x512xf32, #tpu.memory_space<vmem>>, %arg2: memref<196x512xf32, #tpu.memory_space<vmem>>, %arg3: memref<2x512xf32, #tpu.memory_space<vmem>>, %arg4: memref<196x512xf32, #tpu.memory_space<vmem>>) attributes {dimension_semantics = [#tpu.dimension_semantics<arbitrary>], iteration_bounds = array<i64: 1>, scalar_prefetch = 0 : i64, scratch_operands = 0 : i64, tpu.core_type = #tpu.core_type<tc>, window_params = [{transform_indices = @transform_0, window_bounds = array<i64: 196, 512>}, {transform_indices = @transform_1, window_bounds = array<i64: 196, 512>}, {pipeline_mode = #tpu.pipeline_mode<synchronous>, transform_indices = @transform_2, window_bounds = array<i64: 2, 512>}, {transform_indices = @transform_3, window_bounds = array<i64: 196, 512>}]} {
    %c0 = arith.constant 0 : index
    %c0_0 = arith.constant 0 : index
    %0 = vector.load %arg1[%c0, %c0_0] : memref<196x512xf32, #tpu.memory_space<vmem>>, vector<196x512xf32>
    %c0_1 = arith.constant 0 : index
    %c0_2 = arith.constant 0 : index
    %1 = vector.load %arg2[%c0_1, %c0_2] : memref<196x512xf32, #tpu.memory_space<vmem>>, vector<196x512xf32>
    %2 = arith.addf %0, %1 : vector<196x512xf32>
    %cst = arith.constant dense<0.000000e+00> : vector<196xf32>
    %3 = vector.multi_reduction <add>, %2, %cst [1] : vector<196x512xf32> to vector<196xf32>
    %4 = vector.shape_cast %3 : vector<196xf32> to vector<196x1xf32>
    %cst_3 = arith.constant 0.001953125 : f32
    %5 = vector.broadcast %cst_3 : f32 to vector<196x1xf32>
    %6 = arith.mulf %4, %5 : vector<196x1xf32>
    %7 = vector.broadcast %6 : vector<196x1xf32> to vector<196x512xf32>
    %8 = arith.subf %2, %7 : vector<196x512xf32>
    %9 = arith.mulf %8, %8 : vector<196x512xf32>
    %cst_4 = arith.constant dense<0.000000e+00> : vector<196xf32>
    %10 = vector.multi_reduction <add>, %9, %cst_4 [1] : vector<196x512xf32> to vector<196xf32>
    %11 = vector.shape_cast %10 : vector<196xf32> to vector<196x1xf32>
    %cst_5 = arith.constant 0.001953125 : f32
    %12 = vector.broadcast %cst_5 : f32 to vector<196x1xf32>
    %13 = arith.mulf %11, %12 : vector<196x1xf32>
    %cst_6 = arith.constant 9.99999974E-6 : f32
    %14 = vector.broadcast %cst_6 : f32 to vector<196x1xf32>
    %15 = arith.addf %13, %14 : vector<196x1xf32>
    %16 = math.rsqrt %15 : vector<196x1xf32>
    %c0_7 = arith.constant 0 : index
    %c0_8 = arith.constant 0 : index
    %17 = vector.load %arg3[%c0_7, %c0_8] : memref<2x512xf32, #tpu.memory_space<vmem>>, vector<1x512xf32>
    %c1 = arith.constant 1 : index
    %c0_9 = arith.constant 0 : index
    %18 = vector.load %arg3[%c1, %c0_9] : memref<2x512xf32, #tpu.memory_space<vmem>>, vector<1x512xf32>
    %19 = vector.broadcast %16 : vector<196x1xf32> to vector<196x512xf32>
    %20 = arith.mulf %8, %19 : vector<196x512xf32>
    %21 = vector.broadcast %17 : vector<1x512xf32> to vector<196x512xf32>
    %22 = arith.mulf %20, %21 : vector<196x512xf32>
    %23 = vector.broadcast %18 : vector<1x512xf32> to vector<196x512xf32>
    %24 = arith.addf %22, %23 : vector<196x512xf32>
    %c0_10 = arith.constant 0 : index
    %c0_11 = arith.constant 0 : index
    %25 = vector.load %arg4[%c0_10, %c0_11] : memref<196x512xf32, #tpu.memory_space<vmem>>, vector<196x512xf32>
    tpu.vector_store %arg4[%c0_10, %c0_11], %24 {strides = array<i32>} : memref<196x512xf32, #tpu.memory_space<vmem>>, vector<196x512xf32>,
    return
  }
  func.func @transform_0(%arg0: i32) -> (i32, i32) {
    %c0_i32 = arith.constant 0 : i32
    %c0_i32_0 = arith.constant 0 : i32
    return %arg0, %c0_i32 : i32, i32
  }
  func.func @transform_1(%arg0: i32) -> (i32, i32) {
    %c0_i32 = arith.constant 0 : i32
    %c0_i32_0 = arith.constant 0 : i32
    return %arg0, %c0_i32 : i32, i32
  }
  func.func @transform_2(%arg0: i32) -> (i32, i32) {
    %c0_i32 = arith.constant 0 : i32
    %c0_i32_0 = arith.constant 0 : i32
    %c0_i32_1 = arith.constant 0 : i32
    return %c0_i32, %c0_i32_0 : i32, i32
  }
  func.func @transform_3(%arg0: i32) -> (i32, i32) {
    %c0_i32 = arith.constant 0 : i32
    %c0_i32_0 = arith.constant 0 : i32
    return %arg0, %c0_i32 : i32, i32
  }
}

</mosaic_0001>

<llo_original>
// kernel: tpu_custom_call.1
$region0: #{tpu_custom_call.1}
  #allocation0 [shape = 'u32[]', space=smem, size = 0x4, offset = 0x4, fixed_abs, tag = 'smem constant byte address 0x4 - core index']
  #allocation1 [shape = 'u32[72,128]{1,0:T(1,128)}', space=vmem, size = 0x9000, scoped, tag = 'internal scratch']
  %s0 = inlined_call_operand.hbm [shape: f32[196,512], index: 0, kind: input, shape index: {}]
  %s1 = inlined_call_operand.hbm [shape: f32[196,512], index: 1, kind: input, shape index: {}]
  %s2 = inlined_call_operand.hbm [shape: f32[2,512], index: 2, kind: input, shape index: {}]
  %s3 = inlined_call_operand.hbm [shape: f32[196,512], index: 3, kind: output, shape index: {}]
  %s4 = sld [smem:[#allocation0]]
  $region34: #{tpu_custom_call.1} parent=0
    _
  %s6 = ssub.s32 1, %s4
  %s7 = scalar_select 0, %s6, %s4
  $region1: #{tpu_custom_call.1} parent=0
    #allocation2 [shape = 'u8[409600]{0}', space=vmem, size = 0x64000, scoped, tag = 'input window, operand 0, single buffered']
    #allocation3 [shape = 's32[1]{0}', space=sflag, size = 0x4, scoped, tag = 'scoped memory for tpu_custom_call.1']
    #allocation4 [shape = 's32[1]{0}', space=sflag, size = 0x4, scoped, tag = 'scoped memory for tpu_custom_call.1']
    #allocation5 [shape = 'u8[409600]{0}', space=vmem, size = 0x64000, scoped, tag = 'input window, operand 1, single buffered']
    #allocation6 [shape = 's32[1]{0}', space=sflag, size = 0x4, scoped, tag = 'scoped memory for tpu_custom_call.1']
    #allocation7 [shape = 'u8[4096]{0}', space=vmem, size = 0x1000, scoped, tag = 'input window, operand 2, single buffered']
    #allocation8 [shape = 'u8[409600]{0}', space=vmem, size = 0x64000, scoped, tag = 'output window, operand 0, single buffered']
    %8 = vsyncpa [#allocation3], 0
    %9 = vsyncpa [#allocation6], 0
    %10 = vsyncpa [#allocation4], 0
    // Predicated region
    $region2: #{tpu_custom_call.1} parent=1 // pred_check
      _
    $region3: #{tpu_custom_call.1} parent=1 // pred_check_branch
      %12 = sbr.rel (0) target = $region5
    $region4: #{tpu_custom_call.1} parent=1 // pred_region
      %14 = vsyncadd [#allocation3], 0
      %s15 = sshll.u32 %s0, 4
      %s16 = int_to_ptr.hbm [resolvable:$true] %s15
      %s17 = sshll.u32 [#allocation2], 4
      %s18 = int_to_ptr.vmem [resolvable:$true] %s17
      %23 = dma.hbm_to_vmem [thread:$0]  %s16, 12800, %s18, [#allocation3], 512, 512, 32
    $region5: #{tpu_custom_call.1} parent=1 // pred_fallthru
      _
    // Predicated region
    $region6: #{tpu_custom_call.1} parent=1 // pred_check
      _
    $region7: #{tpu_custom_call.1} parent=1 // pred_check_branch
      %25 = sbr.rel (0) target = $region9
    $region8: #{tpu_custom_call.1} parent=1 // pred_region
      %27 = vsyncadd [#allocation6], 0
      %s28 = sshll.u32 %s1, 4
      %s29 = int_to_ptr.hbm [resolvable:$true] %s28
      %s30 = sshll.u32 [#allocation5], 4
      %s31 = int_to_ptr.vmem [resolvable:$true] %s30
      %36 = dma.hbm_to_vmem [thread:$0]  %s29, 12800, %s31, [#allocation6], 512, 512, 32
    $region9: #{tpu_custom_call.1} parent=1 // pred_fallthru
      _
    // Predicated region
    $region10: #{tpu_custom_call.1} parent=1 // pred_check
      _
    $region11: #{tpu_custom_call.1} parent=1 // pred_check_branch
      %38 = sbr.rel (0) target = $region13
    $region12: #{tpu_custom_call.1} parent=1 // pred_region
      %40 = vsyncadd [#allocation6], 0
      %s42 = sshll.u32 %s2, 4
      %s43 = int_to_ptr.hbm [resolvable:$true] %s42
      %s44 = sshll.u32 [#allocation7], 4
      %s45 = int_to_ptr.vmem [resolvable:$true] %s44
      %47 = dma.hbm_to_vmem [thread:$0]  %s43, 128, %s45, [#allocation6]
    $region13: #{tpu_custom_call.1} parent=1 // pred_fallthru
      _
    // Predicated region
    $region14: #{tpu_custom_call.1} parent=1 // pred_check
      _
    $region15: #{tpu_custom_call.1} parent=1 // pred_check_branch
      %49 = sbr.rel (0) target = $region17
    $region16: #{tpu_custom_call.1} parent=1 // pred_region
      %51 = dma.done [#allocation3], 12800
    $region17: #{tpu_custom_call.1} parent=1 // pred_fallthru
      _
    // Predicated region
    $region18: #{tpu_custom_call.1} parent=1 // pred_check
      _
    $region19: #{tpu_custom_call.1} parent=1 // pred_check_branch
      %53 = sbr.rel (0) target = $region21
    $region20: #{tpu_custom_call.1} parent=1 // pred_region
      %55 = dma.done [#allocation6], 12800
    $region21: #{tpu_custom_call.1} parent=1 // pred_fallthru
      _
    // Predicated region
    $region22: #{tpu_custom_call.1} parent=1 // pred_check
      _
    $region23: #{tpu_custom_call.1} parent=1 // pred_check_branch
      %57 = sbr.rel (0) target = $region25
    $region24: #{tpu_custom_call.1} parent=1 // pred_region
      %59 = dma.done [#allocation6], 128
    $region25: #{tpu_custom_call.1} parent=1 // pred_fallthru
      _
    %v60 = vld [vmem:[#allocation2] sm:$0xff]
    %v61 = vld [vmem:[#allocation2 + $0x8] sm:$0xff]
    %v62 = vld [vmem:[#allocation2 + $0x10] sm:$0xff]
    %v63 = vld [vmem:[#allocation2 + $0x18] sm:$0xff]
    %v64 = vld [vmem:[#allocation2 + $0x20] sm:$0xff]
    %v65 = vld [vmem:[#allocation2 + $0x28] sm:$0xff]
    %v66 = vld [vmem:[#allocation2 + $0x30] sm:$0xff]
    %v67 = vld [vmem:[#allocation2 + $0x38] sm:$0xff]
    %v68 = vld [vmem:[#allocation2 + $0x40] sm:$0xff]
    %v69 = vld [vmem:[#allocation2 + $0x48] sm:$0xff]
    %v70 = vld [vmem:[#allocation2 + $0x50] sm:$0xff]
    %v71 = vld [vmem:[#allocation2 + $0x58] sm:$0xff]
    %v72 = vld [vmem:[#allocation2 + $0x60] sm:$0xff]
    %v73 = vld [vmem:[#allocation2 + $0x68] sm:$0xff]
    %v74 = vld [vmem:[#allocation2 + $0x70] sm:$0xff]
    %v75 = vld [vmem:[#allocation2 + $0x78] sm:$0xff]
    %v76 = vld [vmem:[#allocation2 + $0x80] sm:$0xff]
    %v77 = vld [vmem:[#allocation2 + $0x88] sm:$0xff]
    %v78 = vld [vmem:[#allocation2 + $0x90] sm:$0xff]
    %v79 = vld [vmem:[#allocation2 + $0x98] sm:$0xff]
    %v80 = vld [vmem:[#allocation2 + $0xa0] sm:$0xff]
    %v81 = vld [vmem:[#allocation2 + $0xa8] sm:$0xff]
    %v82 = vld [vmem:[#allocation2 + $0xb0] sm:$0xff]
    %v83 = vld [vmem:[#allocation2 + $0xb8] sm:$0xff]
    %v84 = vld [vmem:[#allocation2 + $0xc0] sm:$0xff]
    %v85 = vld [vmem:[#allocation2 + $0xc8] sm:$0xff]
    %v86 = vld [vmem:[#allocation2 + $0xd0] sm:$0xff]
    %v87 = vld [vmem:[#allocation2 + $0xd8] sm:$0xff]
    %v88 = vld [vmem:[#allocation2 + $0xe0] sm:$0xff]
    %v89 = vld [vmem:[#allocation2 + $0xe8] sm:$0xff]
    %v90 = vld [vmem:[#allocation2 + $0xf0] sm:$0xff]
    %v91 = vld [vmem:[#allocation2 + $0xf8] sm:$0xff]
    %v92 = vld [vmem:[#allocation2 + $0x100] sm:$0xff]
    %v93 = vld [vmem:[#allocation2 + $0x108] sm:$0xff]
    %v94 = vld [vmem:[#allocation2 + $0x110] sm:$0xff]
    %v95 = vld [vmem:[#allocation2 + $0x118] sm:$0xff]
    %v96 = vld [vmem:[#allocation2 + $0x120] sm:$0xff]
    %v97 = vld [vmem:[#allocation2 + $0x128] sm:$0xff]
    %v98 = vld [vmem:[#allocation2 + $0x130] sm:$0xff]
    %v99 = vld [vmem:[#allocation2 + $0x138] sm:$0xff]
    %v100 = vld [vmem:[#allocation2 + $0x140] sm:$0xff]
    %v101 = vld [vmem:[#allocation2 + $0x148] sm:$0xff]
    %v102 = vld [vmem:[#allocation2 + $0x150] sm:$0xff]
    %v103 = vld [vmem:[#allocation2 + $0x158] sm:$0xff]
    %v104 = vld [vmem:[#allocation2 + $0x160] sm:$0xff]
    %v105 = vld [vmem:[#allocation2 + $0x168] sm:$0xff]
    %v106 = vld [vmem:[#allocation2 + $0x170] sm:$0xff]
    %v107 = vld [vmem:[#allocation2 + $0x178] sm:$0xff]
    %v108 = vld [vmem:[#allocation2 + $0x180] sm:$0xff]
    %v109 = vld [vmem:[#allocation2 + $0x188] sm:$0xff]
    %v110 = vld [vmem:[#allocation2 + $0x190] sm:$0xff]
    %v111 = vld [vmem:[#allocation2 + $0x198] sm:$0xff]
    %v112 = vld [vmem:[#allocation2 + $0x1a0] sm:$0xff]
    %v113 = vld [vmem:[#allocation2 + $0x1a8] sm:$0xff]
    %v114 = vld [vmem:[#allocation2 + $0x1b0] sm:$0xff]
    %v115 = vld [vmem:[#allocation2 + $0x1b8] sm:$0xff]
    %v116 = vld [vmem:[#allocation2 + $0x1c0] sm:$0xff]
    %v117 = vld [vmem:[#allocation2 + $0x1c8] sm:$0xff]
    %v118 = vld [vmem:[#allocation2 + $0x1d0] sm:$0xff]
    %v119 = vld [vmem:[#allocation2 + $0x1d8] sm:$0xff]
    %v120 = vld [vmem:[#allocation2 + $0x1e0] sm:$0xff]
    %v121 = vld [vmem:[#allocation2 + $0x1e8] sm:$0xff]
    %v122 = vld [vmem:[#allocation2 + $0x1f0] sm:$0xff]
    %v123 = vld [vmem:[#allocation2 + $0x1f8] sm:$0xff]
    %v124 = vld [vmem:[#allocation2 + $0x200] sm:$0xff]
    %v125 = vld [vmem:[#allocation2 + $0x208] sm:$0xff]
    %v126 = vld [vmem:[#allocation2 + $0x210] sm:$0xff]
    %v127 = vld [vmem:[#allocation2 + $0x218] sm:$0xff]
    %v128 = vld [vmem:[#allocation2 + $0x220] sm:$0xff]
    %v129 = vld [vmem:[#allocation2 + $0x228] sm:$0xff]
    %v130 = vld [vmem:[#allocation2 + $0x230] sm:$0xff]
    %v131 = vld [vmem:[#allocation2 + $0x238] sm:$0xff]
    %v132 = vld [vmem:[#allocation2 + $0x240] sm:$0xff]
    %v133 = vld [vmem:[#allocation2 + $0x248] sm:$0xff]
    %v134 = vld [vmem:[#allocation2 + $0x250] sm:$0xff]
    %v135 = vld [vmem:[#allocation2 + $0x258] sm:$0xff]
    %v136 = vld [vmem:[#allocation2 + $0x260] sm:$0xff]
    %v137 = vld [vmem:[#allocation2 + $0x268] sm:$0xff]
    %v138 = vld [vmem:[#allocation2 + $0x270] sm:$0xff]
    %v139 = vld [vmem:[#allocation2 + $0x278] sm:$0xff]
    %v140 = vld [vmem:[#allocation2 + $0x280] sm:$0xff]
    %v141 = vld [vmem:[#allocation2 + $0x288] sm:$0xff]
    %v142 = vld [vmem:[#allocation2 + $0x290] sm:$0xff]
    %v143 = vld [vmem:[#allocation2 + $0x298] sm:$0xff]
    %v144 = vld [vmem:[#allocation2 + $0x2a0] sm:$0xff]
    %v145 = vld [vmem:[#allocation2 + $0x2a8] sm:$0xff]
    %v146 = vld [vmem:[#allocation2 + $0x2b0] sm:$0xff]
    %v147 = vld [vmem:[#allocation2 + $0x2b8] sm:$0xff]
    %v148 = vld [vmem:[#allocation2 + $0x2c0] sm:$0xff]
    %v149 = vld [vmem:[#allocation2 + $0x2c8] sm:$0xff]
    %v150 = vld [vmem:[#allocation2 + $0x2d0] sm:$0xff]
    %v151 = vld [vmem:[#allocation2 + $0x2d8] sm:$0xff]
    %v152 = vld [vmem:[#allocation2 + $0x2e0] sm:$0xff]
    %v153 = vld [vmem:[#allocation2 + $0x2e8] sm:$0xff]
    %v154 = vld [vmem:[#allocation2 + $0x2f0] sm:$0xff]
    %v155 = vld [vmem:[#allocation2 + $0x2f8] sm:$0xff]
    %v156 = vld [vmem:[#allocation2 + $0x300] sm:$0xf]
    %v157 = vld [vmem:[#allocation2 + $0x308] sm:$0xf]
    %v158 = vld [vmem:[#allocation2 + $0x310] sm:$0xf]
    %v159 = vld [vmem:[#allocation2 + $0x318] sm:$0xf]
    %v160 = vld [vmem:[#allocation5] sm:$0xff]
    %v161 = vld [vmem:[#allocation5 + $0x8] sm:$0xff]
    %v162 = vld [vmem:[#allocation5 + $0x10] sm:$0xff]
    %v163 = vld [vmem:[#allocation5 + $0x18] sm:$0xff]
    %v164 = vld [vmem:[#allocation5 + $0x20] sm:$0xff]
    %v165 = vld [vmem:[#allocation5 + $0x28] sm:$0xff]
    %v166 = vld [vmem:[#allocation5 + $0x30] sm:$0xff]
    %v167 = vld [vmem:[#allocation5 + $0x38] sm:$0xff]
    %v168 = vld [vmem:[#allocation5 + $0x40] sm:$0xff]
    %v169 = vld [vmem:[#allocation5 + $0x48] sm:$0xff]
    %v170 = vld [vmem:[#allocation5 + $0x50] sm:$0xff]
    %v171 = vld [vmem:[#allocation5 + $0x58] sm:$0xff]
    %v172 = vld [vmem:[#allocation5 + $0x60] sm:$0xff]
    %v173 = vld [vmem:[#allocation5 + $0x68] sm:$0xff]
    %v174 = vld [vmem:[#allocation5 + $0x70] sm:$0xff]
    %v175 = vld [vmem:[#allocation5 + $0x78] sm:$0xff]
    %v176 = vld [vmem:[#allocation5 + $0x80] sm:$0xff]
    %v177 = vld [vmem:[#allocation5 + $0x88] sm:$0xff]
    %v178 = vld [vmem:[#allocation5 + $0x90] sm:$0xff]
    %v179 = vld [vmem:[#allocation5 + $0x98] sm:$0xff]
    %v180 = vld [vmem:[#allocation5 + $0xa0] sm:$0xff]
    %v181 = vld [vmem:[#allocation5 + $0xa8] sm:$0xff]
    %v182 = vld [vmem:[#allocation5 + $0xb0] sm:$0xff]
    %v183 = vld [vmem:[#allocation5 + $0xb8] sm:$0xff]
    %v184 = vld [vmem:[#allocation5 + $0xc0] sm:$0xff]
    %v185 = vld [vmem:[#allocation5 + $0xc8] sm:$0xff]
    %v186 = vld [vmem:[#allocation5 + $0xd0] sm:$0xff]
    %v187 = vld [vmem:[#allocation5 + $0xd8] sm:$0xff]
    %v188 = vld [vmem:[#allocation5 + $0xe0] sm:$0xff]
    %v189 = vld [vmem:[#allocation5 + $0xe8] sm:$0xff]
    %v190 = vld [vmem:[#allocation5 + $0xf0] sm:$0xff]
    %v191 = vld [vmem:[#allocation5 + $0xf8] sm:$0xff]
    %v192 = vld [vmem:[#allocation5 + $0x100] sm:$0xff]
    %v193 = vld [vmem:[#allocation5 + $0x108] sm:$0xff]
    %v194 = vld [vmem:[#allocation5 + $0x110] sm:$0xff]
    %v195 = vld [vmem:[#allocation5 + $0x118] sm:$0xff]
    %v196 = vld [vmem:[#allocation5 + $0x120] sm:$0xff]
    %v197 = vld [vmem:[#allocation5 + $0x128] sm:$0xff]
    %v198 = vld [vmem:[#allocation5 + $0x130] sm:$0xff]
    %v199 = vld [vmem:[#allocation5 + $0x138] sm:$0xff]
    %v200 = vld [vmem:[#allocation5 + $0x140] sm:$0xff]
    %v201 = vld [vmem:[#allocation5 + $0x148] sm:$0xff]
    %v202 = vld [vmem:[#allocation5 + $0x150] sm:$0xff]
    %v203 = vld [vmem:[#allocation5 + $0x158] sm:$0xff]
    %v204 = vld [vmem:[#allocation5 + $0x160] sm:$0xff]
    %v205 = vld [vmem:[#allocation5 + $0x168] sm:$0xff]
    %v206 = vld [vmem:[#allocation5 + $0x170] sm:$0xff]
    %v207 = vld [vmem:[#allocation5 + $0x178] sm:$0xff]
    %v208 = vld [vmem:[#allocation5 + $0x180] sm:$0xff]
    %v209 = vld [vmem:[#allocation5 + $0x188] sm:$0xff]
    %v210 = vld [vmem:[#allocation5 + $0x190] sm:$0xff]
    %v211 = vld [vmem:[#allocation5 + $0x198] sm:$0xff]
    %v212 = vld [vmem:[#allocation5 + $0x1a0] sm:$0xff]
    %v213 = vld [vmem:[#allocation5 + $0x1a8] sm:$0xff]
    %v214 = vld [vmem:[#allocation5 + $0x1b0] sm:$0xff]
    %v215 = vld [vmem:[#allocation5 + $0x1b8] sm:$0xff]
    %v216 = vld [vmem:[#allocation5 + $0x1c0] sm:$0xff]
    %v217 = vld [vmem:[#allocation5 + $0x1c8] sm:$0xff]
    %v218 = vld [vmem:[#allocation5 + $0x1d0] sm:$0xff]
    %v219 = vld [vmem:[#allocation5 + $0x1d8] sm:$0xff]
    %v220 = vld [vmem:[#allocation5 + $0x1e0] sm:$0xff]
    %v221 = vld [vmem:[#allocation5 + $0x1e8] sm:$0xff]
    %v222 = vld [vmem:[#allocation5 + $0x1f0] sm:$0xff]
    %v223 = vld [vmem:[#allocation5 + $0x1f8] sm:$0xff]
    %v224 = vld [vmem:[#allocation5 + $0x200] sm:$0xff]
    %v225 = vld [vmem:[#allocation5 + $0x208] sm:$0xff]
    %v226 = vld [vmem:[#allocation5 + $0x210] sm:$0xff]
    %v227 = vld [vmem:[#allocation5 + $0x218] sm:$0xff]
    %v228 = vld [vmem:[#allocation5 + $0x220] sm:$0xff]
    %v229 = vld [vmem:[#allocation5 + $0x228] sm:$0xff]
    %v230 = vld [vmem:[#allocation5 + $0x230] sm:$0xff]
    %v231 = vld [vmem:[#allocation5 + $0x238] sm:$0xff]
    %v232 = vld [vmem:[#allocation5 + $0x240] sm:$0xff]
    %v233 = vld [vmem:[#allocation5 + $0x248] sm:$0xff]
    %v234 = vld [vmem:[#allocation5 + $0x250] sm:$0xff]
    %v235 = vld [vmem:[#allocation5 + $0x258] sm:$0xff]
    %v236 = vld [vmem:[#allocation5 + $0x260] sm:$0xff]
    %v237 = vld [vmem:[#allocation5 + $0x268] sm:$0xff]
    %v238 = vld [vmem:[#allocation5 + $0x270] sm:$0xff]
    %v239 = vld [vmem:[#allocation5 + $0x278] sm:$0xff]
    %v240 = vld [vmem:[#allocation5 + $0x280] sm:$0xff]
    %v241 = vld [vmem:[#allocation5 + $0x288] sm:$0xff]
    %v242 = vld [vmem:[#allocation5 + $0x290] sm:$0xff]
    %v243 = vld [vmem:[#allocation5 + $0x298] sm:$0xff]
    %v244 = vld [vmem:[#allocation5 + $0x2a0] sm:$0xff]
    %v245 = vld [vmem:[#allocation5 + $0x2a8] sm:$0xff]
    %v246 = vld [vmem:[#allocation5 + $0x2b0] sm:$0xff]
    %v247 = vld [vmem:[#allocation5 + $0x2b8] sm:$0xff]
    %v248 = vld [vmem:[#allocation5 + $0x2c0] sm:$0xff]
    %v249 = vld [vmem:[#allocation5 + $0x2c8] sm:$0xff]
    %v250 = vld [vmem:[#allocation5 + $0x2d0] sm:$0xff]
    %v251 = vld [vmem:[#allocation5 + $0x2d8] sm:$0xff]
    %v252 = vld [vmem:[#allocation5 + $0x2e0] sm:$0xff]
    %v253 = vld [vmem:[#allocation5 + $0x2e8] sm:$0xff]
    %v254 = vld [vmem:[#allocation5 + $0x2f0] sm:$0xff]
    %v255 = vld [vmem:[#allocation5 + $0x2f8] sm:$0xff]
    %v256 = vld [vmem:[#allocation5 + $0x300] sm:$0xf]
    %v257 = vld [vmem:[#allocation5 + $0x308] sm:$0xf]
    %v258 = vld [vmem:[#allocation5 + $0x310] sm:$0xf]
    %v259 = vld [vmem:[#allocation5 + $0x318] sm:$0xf]
    %v260 = vadd.f32 %v60, %v160
    %v261 = vadd.f32 %v61, %v161
    %v262 = vadd.f32 %v62, %v162
    %v263 = vadd.f32 %v63, %v163
    %v264 = vadd.f32 %v64, %v164
    %v265 = vadd.f32 %v65, %v165
    %v266 = vadd.f32 %v66, %v166
    %v267 = vadd.f32 %v67, %v167
    %v268 = vadd.f32 %v68, %v168
    %v269 = vadd.f32 %v69, %v169
    %v270 = vadd.f32 %v70, %v170
    %v271 = vadd.f32 %v71, %v171
    %v272 = vadd.f32 %v72, %v172
    %v273 = vadd.f32 %v73, %v173
    %v274 = vadd.f32 %v74, %v174
    %v275 = vadd.f32 %v75, %v175
    %v276 = vadd.f32 %v76, %v176
    %v277 = vadd.f32 %v77, %v177
    %v278 = vadd.f32 %v78, %v178
    %v279 = vadd.f32 %v79, %v179
    %v280 = vadd.f32 %v80, %v180
    %v281 = vadd.f32 %v81, %v181
    %v282 = vadd.f32 %v82, %v182
    %v283 = vadd.f32 %v83, %v183
    %v284 = vadd.f32 %v84, %v184
    %v285 = vadd.f32 %v85, %v185
    %v286 = vadd.f32 %v86, %v186
    %v287 = vadd.f32 %v87, %v187
    %v288 = vadd.f32 %v88, %v188
    %v289 = vadd.f32 %v89, %v189
    %v290 = vadd.f32 %v90, %v190
    %v291 = vadd.f32 %v91, %v191
    %v292 = vadd.f32 %v92, %v192
    %v293 = vadd.f32 %v93, %v193
    %v294 = vadd.f32 %v94, %v194
    %v295 = vadd.f32 %v95, %v195
    %v296 = vadd.f32 %v96, %v196
    %v297 = vadd.f32 %v97, %v197
    %v298 = vadd.f32 %v98, %v198
    %v299 = vadd.f32 %v99, %v199
    %v300 = vadd.f32 %v100, %v200
    %v301 = vadd.f32 %v101, %v201
    %v302 = vadd.f32 %v102, %v202
    %v303 = vadd.f32 %v103, %v203
    %v304 = vadd.f32 %v104, %v204
    %v305 = vadd.f32 %v105, %v205
    %v306 = vadd.f32 %v106, %v206
    %v307 = vadd.f32 %v107, %v207
    %v308 = vadd.f32 %v108, %v208
    %v309 = vadd.f32 %v109, %v209
    %v310 = vadd.f32 %v110, %v210
    %v311 = vadd.f32 %v111, %v211
    %v312 = vadd.f32 %v112, %v212
    %v313 = vadd.f32 %v113, %v213
    %v314 = vadd.f32 %v114, %v214
    %v315 = vadd.f32 %v115, %v215
    %v316 = vadd.f32 %v116, %v216
    %v317 = vadd.f32 %v117, %v217
    %v318 = vadd.f32 %v118, %v218
    %v319 = vadd.f32 %v119, %v219
    %v320 = vadd.f32 %v120, %v220
    %v321 = vadd.f32 %v121, %v221
    %v322 = vadd.f32 %v122, %v222
    %v323 = vadd.f32 %v123, %v223
    %v324 = vadd.f32 %v124, %v224
    %v325 = vadd.f32 %v125, %v225
    %v326 = vadd.f32 %v126, %v226
    %v327 = vadd.f32 %v127, %v227
    %v328 = vadd.f32 %v128, %v228
    %v329 = vadd.f32 %v129, %v229
    %v330 = vadd.f32 %v130, %v230
    %v331 = vadd.f32 %v131, %v231
    %v332 = vadd.f32 %v132, %v232
    %v333 = vadd.f32 %v133, %v233
    %v334 = vadd.f32 %v134, %v234
    %v335 = vadd.f32 %v135, %v235
    %v336 = vadd.f32 %v136, %v236
    %v337 = vadd.f32 %v137, %v237
    %v338 = vadd.f32 %v138, %v238
    %v339 = vadd.f32 %v139, %v239
    %v340 = vadd.f32 %v140, %v240
    %v341 = vadd.f32 %v141, %v241
    %v342 = vadd.f32 %v142, %v242
    %v343 = vadd.f32 %v143, %v243
    %v344 = vadd.f32 %v144, %v244
    %v345 = vadd.f32 %v145, %v245
    %v346 = vadd.f32 %v146, %v246
    %v347 = vadd.f32 %v147, %v247
    %v348 = vadd.f32 %v148, %v248
    %v349 = vadd.f32 %v149, %v249
    %v350 = vadd.f32 %v150, %v250
    %v351 = vadd.f32 %v151, %v251
    %v352 = vadd.f32 %v152, %v252
    %v353 = vadd.f32 %v153, %v253
    %v354 = vadd.f32 %v154, %v254
    %v355 = vadd.f32 %v155, %v255
    %v356 = vadd.f32 %v156, %v256
    %v357 = vadd.f32 %v157, %v257
    %v358 = vadd.f32 %v158, %v258
    %v359 = vadd.f32 %v159, %v259
    %v360 = vadd.f32 %v260, %v261
    %v361 = vadd.f32 %v360, %v262
    %v362 = vadd.f32 %v361, %v263
    %363 = vadd.xlane.f32.xlu0 %v362
    %v364 = vpop.xlane.xlu0 %363
    %v365 = vadd.f32 %v264, %v265
    %v366 = vadd.f32 %v365, %v266
    %v367 = vadd.f32 %v366, %v267
    %368 = vadd.xlane.f32.xlu0 %v367
    %v369 = vpop.xlane.xlu0 %368
    %v370 = vadd.f32 %v268, %v269
    %v371 = vadd.f32 %v370, %v270
    %v372 = vadd.f32 %v371, %v271
    %373 = vadd.xlane.f32.xlu0 %v372
    %v374 = vpop.xlane.xlu0 %373
    %v375 = vadd.f32 %v272, %v273
    %v376 = vadd.f32 %v375, %v274
    %v377 = vadd.f32 %v376, %v275
    %378 = vadd.xlane.f32.xlu0 %v377
    %v379 = vpop.xlane.xlu0 %378
    %v380 = vadd.f32 %v276, %v277
    %v381 = vadd.f32 %v380, %v278
    %v382 = vadd.f32 %v381, %v279
    %383 = vadd.xlane.f32.xlu0 %v382
    %v384 = vpop.xlane.xlu0 %383
    %v385 = vadd.f32 %v280, %v281
    %v386 = vadd.f32 %v385, %v282
    %v387 = vadd.f32 %v386, %v283
    %388 = vadd.xlane.f32.xlu0 %v387
    %v389 = vpop.xlane.xlu0 %388
    %v390 = vadd.f32 %v284, %v285
    %v391 = vadd.f32 %v390, %v286
    %v392 = vadd.f32 %v391, %v287
    %393 = vadd.xlane.f32.xlu0 %v392
    %v394 = vpop.xlane.xlu0 %393
    %v395 = vadd.f32 %v288, %v289
    %v396 = vadd.f32 %v395, %v290
    %v397 = vadd.f32 %v396, %v291
    %398 = vadd.xlane.f32.xlu0 %v397
    %v399 = vpop.xlane.xlu0 %398
    %v400 = vadd.f32 %v292, %v293
    %v401 = vadd.f32 %v400, %v294
    %v402 = vadd.f32 %v401, %v295
    %403 = vadd.xlane.f32.xlu0 %v402
    %v404 = vpop.xlane.xlu0 %403
    %v405 = vadd.f32 %v296, %v297
    %v406 = vadd.f32 %v405, %v298
    %v407 = vadd.f32 %v406, %v299
    %408 = vadd.xlane.f32.xlu0 %v407
    %v409 = vpop.xlane.xlu0 %408
    %v410 = vadd.f32 %v300, %v301
    %v411 = vadd.f32 %v410, %v302
    %v412 = vadd.f32 %v411, %v303
    %413 = vadd.xlane.f32.xlu0 %v412
    %v414 = vpop.xlane.xlu0 %413
    %v415 = vadd.f32 %v304, %v305
    %v416 = vadd.f32 %v415, %v306
    %v417 = vadd.f32 %v416, %v307
    %418 = vadd.xlane.f32.xlu0 %v417
    %v419 = vpop.xlane.xlu0 %418
    %v420 = vadd.f32 %v308, %v309
    %v421 = vadd.f32 %v420, %v310
    %v422 = vadd.f32 %v421, %v311
    %423 = vadd.xlane.f32.xlu0 %v422
    %v424 = vpop.xlane.xlu0 %423
    %v425 = vadd.f32 %v312, %v313
    %v426 = vadd.f32 %v425, %v314
    %v427 = vadd.f32 %v426, %v315
    %428 = vadd.xlane.f32.xlu0 %v427
    %v429 = vpop.xlane.xlu0 %428
    %v430 = vadd.f32 %v316, %v317
    %v431 = vadd.f32 %v430, %v318
    %v432 = vadd.f32 %v431, %v319
    %433 = vadd.xlane.f32.xlu0 %v432
    %v434 = vpop.xlane.xlu0 %433
    %v435 = vadd.f32 %v320, %v321
    %v436 = vadd.f32 %v435, %v322
    %v437 = vadd.f32 %v436, %v323
    %438 = vadd.xlane.f32.xlu0 %v437
    %v439 = vpop.xlane.xlu0 %438
    %v440 = vadd.f32 %v324, %v325
    %v441 = vadd.f32 %v440, %v326
    %v442 = vadd.f32 %v441, %v327
    %443 = vadd.xlane.f32.xlu0 %v442
    %v444 = vpop.xlane.xlu0 %443
    %v445 = vadd.f32 %v328, %v329
    %v446 = vadd.f32 %v445, %v330
    %v447 = vadd.f32 %v446, %v331
    %448 = vadd.xlane.f32.xlu0 %v447
    %v449 = vpop.xlane.xlu0 %448
    %v450 = vadd.f32 %v332, %v333
    %v451 = vadd.f32 %v450, %v334
    %v452 = vadd.f32 %v451, %v335
    %453 = vadd.xlane.f32.xlu0 %v452
    %v454 = vpop.xlane.xlu0 %453
    %v455 = vadd.f32 %v336, %v337
    %v456 = vadd.f32 %v455, %v338
    %v457 = vadd.f32 %v456, %v339
    %458 = vadd.xlane.f32.xlu0 %v457
    %v459 = vpop.xlane.xlu0 %458
    %v460 = vadd.f32 %v340, %v341
    %v461 = vadd.f32 %v460, %v342
    %v462 = vadd.f32 %v461, %v343
    %463 = vadd.xlane.f32.xlu0 %v462
    %v464 = vpop.xlane.xlu0 %463
    %v465 = vadd.f32 %v344, %v345
    %v466 = vadd.f32 %v465, %v346
    %v467 = vadd.f32 %v466, %v347
    %468 = vadd.xlane.f32.xlu0 %v467
    %v469 = vpop.xlane.xlu0 %468
    %v470 = vadd.f32 %v348, %v349
    %v471 = vadd.f32 %v470, %v350
    %v472 = vadd.f32 %v471, %v351
    %473 = vadd.xlane.f32.xlu0 %v472
    %v474 = vpop.xlane.xlu0 %473
    %v475 = vadd.f32 %v352, %v353
    %v476 = vadd.f32 %v475, %v354
    %v477 = vadd.f32 %v476, %v355
    %478 = vadd.xlane.f32.xlu0 %v477
    %v479 = vpop.xlane.xlu0 %478
    %vm480 = vcmask 1043456
    %v481 = vsel %vm480, %v356, 0.0
    %v482 = vsel %vm480, %v357, 0.0
    %v483 = vadd.f32 %v481, %v482
    %v484 = vsel %vm480, %v358, 0.0
    %v485 = vadd.f32 %v483, %v484
    %v486 = vsel %vm480, %v359, 0.0
    %v487 = vadd.f32 %v485, %v486
    %488 = vadd.xlane.f32.xlu0 %v487
    %v489 = vpop.xlane.xlu0 %488
    %v490 = vmul.f32 %v364, 0.001953125
    %v491 = vmul.f32 %v369, 0.001953125
    %v492 = vmul.f32 %v374, 0.001953125
    %v493 = vmul.f32 %v379, 0.001953125
    %v494 = vmul.f32 %v384, 0.001953125
    %v495 = vmul.f32 %v389, 0.001953125
    %v496 = vmul.f32 %v394, 0.001953125
    %v497 = vmul.f32 %v399, 0.001953125
    %v498 = vmul.f32 %v404, 0.001953125
    %v499 = vmul.f32 %v409, 0.001953125
    %v500 = vmul.f32 %v414, 0.001953125
    %v501 = vmul.f32 %v419, 0.001953125
    %v502 = vmul.f32 %v424, 0.001953125
    %v503 = vmul.f32 %v429, 0.001953125
    %v504 = vmul.f32 %v434, 0.001953125
    %v505 = vmul.f32 %v439, 0.001953125
    %v506 = vmul.f32 %v444, 0.001953125
    %v507 = vmul.f32 %v449, 0.001953125
    %v508 = vmul.f32 %v454, 0.001953125
    %v509 = vmul.f32 %v459, 0.001953125
    %v510 = vmul.f32 %v464, 0.001953125
    %v511 = vmul.f32 %v469, 0.001953125
    %v512 = vmul.f32 %v474, 0.001953125
    %v513 = vmul.f32 %v479, 0.001953125
    %v514 = vmul.f32 %v489, 0.001953125
    %v515 = vsub.f32 %v260, %v490
    %v516 = vsub.f32 %v261, %v490
    %v517 = vsub.f32 %v262, %v490
    %v518 = vsub.f32 %v263, %v490
    %v519 = vsub.f32 %v264, %v491
    %v520 = vsub.f32 %v265, %v491
    %v521 = vsub.f32 %v266, %v491
    %v522 = vsub.f32 %v267, %v491
    %v523 = vsub.f32 %v268, %v492
    %v524 = vsub.f32 %v269, %v492
    %v525 = vsub.f32 %v270, %v492
    %v526 = vsub.f32 %v271, %v492
    %v527 = vsub.f32 %v272, %v493
    %v528 = vsub.f32 %v273, %v493
    %v529 = vsub.f32 %v274, %v493
    %v530 = vsub.f32 %v275, %v493
    %v531 = vsub.f32 %v276, %v494
    %v532 = vsub.f32 %v277, %v494
    %v533 = vsub.f32 %v278, %v494
    %v534 = vsub.f32 %v279, %v494
    %v535 = vsub.f32 %v280, %v495
    %v536 = vsub.f32 %v281, %v495
    %v537 = vsub.f32 %v282, %v495
    %v538 = vsub.f32 %v283, %v495
    %v539 = vsub.f32 %v284, %v496
    %v540 = vsub.f32 %v285, %v496
    %v541 = vsub.f32 %v286, %v496
    %v542 = vsub.f32 %v287, %v496
    %v543 = vsub.f32 %v288, %v497
    %v544 = vsub.f32 %v289, %v497
    %v545 = vsub.f32 %v290, %v497
    %v546 = vsub.f32 %v291, %v497
    %v547 = vsub.f32 %v292, %v498
    %v548 = vsub.f32 %v293, %v498
    %v549 = vsub.f32 %v294, %v498
    %v550 = vsub.f32 %v295, %v498
    %v551 = vsub.f32 %v296, %v499
    %v552 = vsub.f32 %v297, %v499
    %v553 = vsub.f32 %v298, %v499
    %v554 = vsub.f32 %v299, %v499
    %v555 = vsub.f32 %v300, %v500
    %v556 = vsub.f32 %v301, %v500
    %v557 = vsub.f32 %v302, %v500
    %v558 = vsub.f32 %v303, %v500
    %v559 = vsub.f32 %v304, %v501
    %v560 = vsub.f32 %v305, %v501
    %v561 = vsub.f32 %v306, %v501
    %v562 = vsub.f32 %v307, %v501
    %v563 = vsub.f32 %v308, %v502
    %v564 = vsub.f32 %v309, %v502
    %v565 = vsub.f32 %v310, %v502
    %v566 = vsub.f32 %v311, %v502
    %v567 = vsub.f32 %v312, %v503
    %v568 = vsub.f32 %v313, %v503
    %v569 = vsub.f32 %v314, %v503
    %v570 = vsub.f32 %v315, %v503
    %v571 = vsub.f32 %v316, %v504
    %v572 = vsub.f32 %v317, %v504
    %v573 = vsub.f32 %v318, %v504
    %v574 = vsub.f32 %v319, %v504
    %v575 = vsub.f32 %v320, %v505
    %v576 = vsub.f32 %v321, %v505
    %v577 = vsub.f32 %v322, %v505
    %v578 = vsub.f32 %v323, %v505
    %v579 = vsub.f32 %v324, %v506
    %v580 = vsub.f32 %v325, %v506
    %v581 = vsub.f32 %v326, %v506
    %v582 = vsub.f32 %v327, %v506
    %v583 = vsub.f32 %v328, %v507
    %v584 = vsub.f32 %v329, %v507
    %v585 = vsub.f32 %v330, %v507
    %v586 = vsub.f32 %v331, %v507
    %v587 = vsub.f32 %v332, %v508
    %v588 = vsub.f32 %v333, %v508
    %v589 = vsub.f32 %v334, %v508
    %v590 = vsub.f32 %v335, %v508
    %v591 = vsub.f32 %v336, %v509
    %v592 = vsub.f32 %v337, %v509
    %v593 = vsub.f32 %v338, %v509
    %v594 = vsub.f32 %v339, %v509
    %v595 = vsub.f32 %v340, %v510
    %v596 = vsub.f32 %v341, %v510
    %v597 = vsub.f32 %v342, %v510
    %v598 = vsub.f32 %v343, %v510
    %v599 = vsub.f32 %v344, %v511
    %v600 = vsub.f32 %v345, %v511
    %v601 = vsub.f32 %v346, %v511
    %v602 = vsub.f32 %v347, %v511
    %v603 = vsub.f32 %v348, %v512
    %v604 = vsub.f32 %v349, %v512
    %v605 = vsub.f32 %v350, %v512
    %v606 = vsub.f32 %v351, %v512
    %v607 = vsub.f32 %v352, %v513
    %v608 = vsub.f32 %v353, %v513
    %v609 = vsub.f32 %v354, %v513
    %v610 = vsub.f32 %v355, %v513
    %v611 = vsub.f32 %v356, %v514
    %v612 = vsub.f32 %v357, %v514
    %v613 = vsub.f32 %v358, %v514
    %v614 = vsub.f32 %v359, %v514
    %v615 = vmul.f32 %v515, %v515
    %v616 = vmul.f32 %v516, %v516
    %v617 = vmul.f32 %v517, %v517
    %v618 = vmul.f32 %v518, %v518
    %v619 = vmul.f32 %v519, %v519
    %v620 = vmul.f32 %v520, %v520
    %v621 = vmul.f32 %v521, %v521
    %v622 = vmul.f32 %v522, %v522
    %v623 = vmul.f32 %v523, %v523
    %v624 = vmul.f32 %v524, %v524
    %v625 = vmul.f32 %v525, %v525
    %v626 = vmul.f32 %v526, %v526
    %v627 = vmul.f32 %v527, %v527
    %v628 = vmul.f32 %v528, %v528
    %v629 = vmul.f32 %v529, %v529
    %v630 = vmul.f32 %v530, %v530
    %v631 = vmul.f32 %v531, %v531
    %v632 = vmul.f32 %v532, %v532
    %v633 = vmul.f32 %v533, %v533
    %v634 = vmul.f32 %v534, %v534
    %v635 = vmul.f32 %v535, %v535
    %v636 = vmul.f32 %v536, %v536
    %v637 = vmul.f32 %v537, %v537
    %v638 = vmul.f32 %v538, %v538
    %v639 = vmul.f32 %v539, %v539
    %v640 = vmul.f32 %v540, %v540
    %v641 = vmul.f32 %v541, %v541
    %v642 = vmul.f32 %v542, %v542
    %v643 = vmul.f32 %v543, %v543
    %v644 = vmul.f32 %v544, %v544
    %v645 = vmul.f32 %v545, %v545
    %v646 = vmul.f32 %v546, %v546
    %v647 = vmul.f32 %v547, %v547
    %v648 = vmul.f32 %v548, %v548
    %v649 = vmul.f32 %v549, %v549
    %v650 = vmul.f32 %v550, %v550
    %v651 = vmul.f32 %v551, %v551
    %v652 = vmul.f32 %v552, %v552
    %v653 = vmul.f32 %v553, %v553
    %v654 = vmul.f32 %v554, %v554
    %v655 = vmul.f32 %v555, %v555
    %v656 = vmul.f32 %v556, %v556
    %v657 = vmul.f32 %v557, %v557
    %v658 = vmul.f32 %v558, %v558
    %v659 = vmul.f32 %v559, %v559
    %v660 = vmul.f32 %v560, %v560
    %v661 = vmul.f32 %v561, %v561
    %v662 = vmul.f32 %v562, %v562
    %v663 = vmul.f32 %v563, %v563
    %v664 = vmul.f32 %v564, %v564
    %v665 = vmul.f32 %v565, %v565
    %v666 = vmul.f32 %v566, %v566
    %v667 = vmul.f32 %v567, %v567
    %v668 = vmul.f32 %v568, %v568
    %v669 = vmul.f32 %v569, %v569
    %v670 = vmul.f32 %v570, %v570
    %v671 = vmul.f32 %v571, %v571
    %v672 = vmul.f32 %v572, %v572
    %v673 = vmul.f32 %v573, %v573
    %v674 = vmul.f32 %v574, %v574
    %v675 = vmul.f32 %v575, %v575
    %v676 = vmul.f32 %v576, %v576
    %v677 = vmul.f32 %v577, %v577
    %v678 = vmul.f32 %v578, %v578
    %v679 = vmul.f32 %v579, %v579
    %v680 = vmul.f32 %v580, %v580
    %v681 = vmul.f32 %v581, %v581
    %v682 = vmul.f32 %v582, %v582
    %v683 = vmul.f32 %v583, %v583
    %v684 = vmul.f32 %v584, %v584
    %v685 = vmul.f32 %v585, %v585
    %v686 = vmul.f32 %v586, %v586
    %v687 = vmul.f32 %v587, %v587
    %v688 = vmul.f32 %v588, %v588
    %v689 = vmul.f32 %v589, %v589
    %v690 = vmul.f32 %v590, %v590
    %v691 = vmul.f32 %v591, %v591
    %v692 = vmul.f32 %v592, %v592
    %v693 = vmul.f32 %v593, %v593
    %v694 = vmul.f32 %v594, %v594
    %v695 = vmul.f32 %v595, %v595
    %v696 = vmul.f32 %v596, %v596
    %v697 = vmul.f32 %v597, %v597
    %v698 = vmul.f32 %v598, %v598
    %v699 = vmul.f32 %v599, %v599
    %v700 = vmul.f32 %v600, %v600
    %v701 = vmul.f32 %v601, %v601
    %v702 = vmul.f32 %v602, %v602
    %v703 = vmul.f32 %v603, %v603
    %v704 = vmul.f32 %v604, %v604
    %v705 = vmul.f32 %v605, %v605
    %v706 = vmul.f32 %v606, %v606
    %v707 = vmul.f32 %v607, %v607
    %v708 = vmul.f32 %v608, %v608
    %v709 = vmul.f32 %v609, %v609
    %v710 = vmul.f32 %v610, %v610
    %v711 = vmul.f32 %v611, %v611
    %v712 = vmul.f32 %v612, %v612
    %v713 = vmul.f32 %v613, %v613
    %v714 = vmul.f32 %v614, %v614
    %v715 = vadd.f32 %v615, %v616
    %v716 = vadd.f32 %v715, %v617
    %v717 = vadd.f32 %v716, %v618
    %718 = vadd.xlane.f32.xlu0 %v717
    %v719 = vpop.xlane.xlu0 %718
    %v720 = vadd.f32 %v619, %v620
    %v721 = vadd.f32 %v720, %v621
    %v722 = vadd.f32 %v721, %v622
    %723 = vadd.xlane.f32.xlu0 %v722
    %v724 = vpop.xlane.xlu0 %723
    %v725 = vadd.f32 %v623, %v624
    %v726 = vadd.f32 %v725, %v625
    %v727 = vadd.f32 %v726, %v626
    %728 = vadd.xlane.f32.xlu0 %v727
    %v729 = vpop.xlane.xlu0 %728
    %v730 = vadd.f32 %v627, %v628
    %v731 = vadd.f32 %v730, %v629
    %v732 = vadd.f32 %v731, %v630
    %733 = vadd.xlane.f32.xlu0 %v732
    %v734 = vpop.xlane.xlu0 %733
    %v735 = vadd.f32 %v631, %v632
    %v736 = vadd.f32 %v735, %v633
    %v737 = vadd.f32 %v736, %v634
    %738 = vadd.xlane.f32.xlu0 %v737
    %v739 = vpop.xlane.xlu0 %738
    %v740 = vadd.f32 %v635, %v636
    %v741 = vadd.f32 %v740, %v637
    %v742 = vadd.f32 %v741, %v638
    %743 = vadd.xlane.f32.xlu0 %v742
    %v744 = vpop.xlane.xlu0 %743
    %v745 = vadd.f32 %v639, %v640
    %v746 = vadd.f32 %v745, %v641
    %v747 = vadd.f32 %v746, %v642
    %748 = vadd.xlane.f32.xlu0 %v747
    %v749 = vpop.xlane.xlu0 %748
    %v750 = vadd.f32 %v643, %v644
    %v751 = vadd.f32 %v750, %v645
    %v752 = vadd.f32 %v751, %v646
    %753 = vadd.xlane.f32.xlu0 %v752
    %v754 = vpop.xlane.xlu0 %753
    %v755 = vadd.f32 %v647, %v648
    %v756 = vadd.f32 %v755, %v649
    %v757 = vadd.f32 %v756, %v650
    %758 = vadd.xlane.f32.xlu0 %v757
    %v759 = vpop.xlane.xlu0 %758
    %v760 = vadd.f32 %v651, %v652
    %v761 = vadd.f32 %v760, %v653
    %v762 = vadd.f32 %v761, %v654
    %763 = vadd.xlane.f32.xlu0 %v762
    %v764 = vpop.xlane.xlu0 %763
    %v765 = vadd.f32 %v655, %v656
    %v766 = vadd.f32 %v765, %v657
    %v767 = vadd.f32 %v766, %v658
    %768 = vadd.xlane.f32.xlu0 %v767
    %v769 = vpop.xlane.xlu0 %768
    %v770 = vadd.f32 %v659, %v660
    %v771 = vadd.f32 %v770, %v661
    %v772 = vadd.f32 %v771, %v662
    %773 = vadd.xlane.f32.xlu0 %v772
    %v774 = vpop.xlane.xlu0 %773
    %v775 = vadd.f32 %v663, %v664
    %v776 = vadd.f32 %v775, %v665
    %v777 = vadd.f32 %v776, %v666
    %778 = vadd.xlane.f32.xlu0 %v777
    %v779 = vpop.xlane.xlu0 %778
    %v780 = vadd.f32 %v667, %v668
    %v781 = vadd.f32 %v780, %v669
    %v782 = vadd.f32 %v781, %v670
    %783 = vadd.xlane.f32.xlu0 %v782
    %v784 = vpop.xlane.xlu0 %783
    %v785 = vadd.f32 %v671, %v672
    %v786 = vadd.f32 %v785, %v673
    %v787 = vadd.f32 %v786, %v674
    %788 = vadd.xlane.f32.xlu0 %v787
    %v789 = vpop.xlane.xlu0 %788
    %v790 = vadd.f32 %v675, %v676
    %v791 = vadd.f32 %v790, %v677
    %v792 = vadd.f32 %v791, %v678
    %793 = vadd.xlane.f32.xlu0 %v792
    %v794 = vpop.xlane.xlu0 %793
    %v795 = vadd.f32 %v679, %v680
    %v796 = vadd.f32 %v795, %v681
    %v797 = vadd.f32 %v796, %v682
    %798 = vadd.xlane.f32.xlu0 %v797
    %v799 = vpop.xlane.xlu0 %798
    %v800 = vadd.f32 %v683, %v684
    %v801 = vadd.f32 %v800, %v685
    %v802 = vadd.f32 %v801, %v686
    %803 = vadd.xlane.f32.xlu0 %v802
    %v804 = vpop.xlane.xlu0 %803
    %v805 = vadd.f32 %v687, %v688
    %v806 = vadd.f32 %v805, %v689
    %v807 = vadd.f32 %v806, %v690
    %808 = vadd.xlane.f32.xlu0 %v807
    %v809 = vpop.xlane.xlu0 %808
    %v810 = vadd.f32 %v691, %v692
    %v811 = vadd.f32 %v810, %v693
    %v812 = vadd.f32 %v811, %v694
    %813 = vadd.xlane.f32.xlu0 %v812
    %v814 = vpop.xlane.xlu0 %813
    %v815 = vadd.f32 %v695, %v696
    %v816 = vadd.f32 %v815, %v697
    %v817 = vadd.f32 %v816, %v698
    %818 = vadd.xlane.f32.xlu0 %v817
    %v819 = vpop.xlane.xlu0 %818
    %v820 = vadd.f32 %v699, %v700
    %v821 = vadd.f32 %v820, %v701
    %v822 = vadd.f32 %v821, %v702
    %823 = vadd.xlane.f32.xlu0 %v822
    %v824 = vpop.xlane.xlu0 %823
    %v825 = vadd.f32 %v703, %v704
    %v826 = vadd.f32 %v825, %v705
    %v827 = vadd.f32 %v826, %v706
    %828 = vadd.xlane.f32.xlu0 %v827
    %v829 = vpop.xlane.xlu0 %828
    %v830 = vadd.f32 %v707, %v708
    %v831 = vadd.f32 %v830, %v709
    %v832 = vadd.f32 %v831, %v710
    %833 = vadd.xlane.f32.xlu0 %v832
    %v834 = vpop.xlane.xlu0 %833
    %v835 = vsel %vm480, %v711, 0.0
    %v836 = vsel %vm480, %v712, 0.0
    %v837 = vadd.f32 %v835, %v836
    %v838 = vsel %vm480, %v713, 0.0
    %v839 = vadd.f32 %v837, %v838
    %v840 = vsel %vm480, %v714, 0.0
    %v841 = vadd.f32 %v839, %v840
    %842 = vadd.xlane.f32.xlu0 %v841
    %v843 = vpop.xlane.xlu0 %842
    %v844 = vmul.f32 %v719, 0.001953125
    %v845 = vmul.f32 %v724, 0.001953125
    %v846 = vmul.f32 %v729, 0.001953125
    %v847 = vmul.f32 %v734, 0.001953125
    %v848 = vmul.f32 %v739, 0.001953125
    %v849 = vmul.f32 %v744, 0.001953125
    %v850 = vmul.f32 %v749, 0.001953125
    %v851 = vmul.f32 %v754, 0.001953125
    %v852 = vmul.f32 %v759, 0.001953125
    %v853 = vmul.f32 %v764, 0.001953125
    %v854 = vmul.f32 %v769, 0.001953125
    %v855 = vmul.f32 %v774, 0.001953125
    %v856 = vmul.f32 %v779, 0.001953125
    %v857 = vmul.f32 %v784, 0.001953125
    %v858 = vmul.f32 %v789, 0.001953125
    %v859 = vmul.f32 %v794, 0.001953125
    %v860 = vmul.f32 %v799, 0.001953125
    %v861 = vmul.f32 %v804, 0.001953125
    %v862 = vmul.f32 %v809, 0.001953125
    %v863 = vmul.f32 %v814, 0.001953125
    %v864 = vmul.f32 %v819, 0.001953125
    %v865 = vmul.f32 %v824, 0.001953125
    %v866 = vmul.f32 %v829, 0.001953125
    %v867 = vmul.f32 %v834, 0.001953125
    %v868 = vmul.f32 %v843, 0.001953125
    %v869 = vadd.f32 %v844, 1e-05
    %v870 = vadd.f32 %v845, 1e-05
    %v871 = vadd.f32 %v846, 1e-05
    %v872 = vadd.f32 %v847, 1e-05
    %v873 = vadd.f32 %v848, 1e-05
    %v874 = vadd.f32 %v849, 1e-05
    %v875 = vadd.f32 %v850, 1e-05
    %v876 = vadd.f32 %v851, 1e-05
    %v877 = vadd.f32 %v852, 1e-05
    %v878 = vadd.f32 %v853, 1e-05
    %v879 = vadd.f32 %v854, 1e-05
    %v880 = vadd.f32 %v855, 1e-05
    %v881 = vadd.f32 %v856, 1e-05
    %v882 = vadd.f32 %v857, 1e-05
    %v883 = vadd.f32 %v858, 1e-05
    %v884 = vadd.f32 %v859, 1e-05
    %v885 = vadd.f32 %v860, 1e-05
    %v886 = vadd.f32 %v861, 1e-05
    %v887 = vadd.f32 %v862, 1e-05
    %v888 = vadd.f32 %v863, 1e-05
    %v889 = vadd.f32 %v864, 1e-05
    %v890 = vadd.f32 %v865, 1e-05
    %v891 = vadd.f32 %v866, 1e-05
    %v892 = vadd.f32 %v867, 1e-05
    %v893 = vadd.f32 %v868, 1e-05
    %v894 = vrsqrt.pop %v869
    %v895 = vmul.f32 %v894, %v869
    %v896 = vmul.f32 %v895, %v894
    %v897 = vmul.f32 0.5, %v896
    %v898 = vsub.f32 1.5, %v897
    %v899 = vmul.f32 %v894, %v898
    %vm900 = vweird.f32 %v869
    %vm901 = vweird.f32 %v894
    %vm902 = vmor %vm900, %vm901
    %v903 = vsel %vm902, %v894, %v899
    %v904 = vrsqrt.pop %v870
    %v905 = vmul.f32 %v904, %v870
    %v906 = vmul.f32 %v905, %v904
    %v907 = vmul.f32 0.5, %v906
    %v908 = vsub.f32 1.5, %v907
    %v909 = vmul.f32 %v904, %v908
    %vm910 = vweird.f32 %v870
    %vm911 = vweird.f32 %v904
    %vm912 = vmor %vm910, %vm911
    %v913 = vsel %vm912, %v904, %v909
    %v914 = vrsqrt.pop %v871
    %v915 = vmul.f32 %v914, %v871
    %v916 = vmul.f32 %v915, %v914
    %v917 = vmul.f32 0.5, %v916
    %v918 = vsub.f32 1.5, %v917
    %v919 = vmul.f32 %v914, %v918
    %vm920 = vweird.f32 %v871
    %vm921 = vweird.f32 %v914
    %vm922 = vmor %vm920, %vm921
    %v923 = vsel %vm922, %v914, %v919
    %v924 = vrsqrt.pop %v872
    %v925 = vmul.f32 %v924, %v872
    %v926 = vmul.f32 %v925, %v924
    %v927 = vmul.f32 0.5, %v926
    %v928 = vsub.f32 1.5, %v927
    %v929 = vmul.f32 %v924, %v928
    %vm930 = vweird.f32 %v872
    %vm931 = vweird.f32 %v924
    %vm932 = vmor %vm930, %vm931
    %v933 = vsel %vm932, %v924, %v929
    %v934 = vrsqrt.pop %v873
    %v935 = vmul.f32 %v934, %v873
    %v936 = vmul.f32 %v935, %v934
    %v937 = vmul.f32 0.5, %v936
    %v938 = vsub.f32 1.5, %v937
    %v939 = vmul.f32 %v934, %v938
    %vm940 = vweird.f32 %v873
    %vm941 = vweird.f32 %v934
    %vm942 = vmor %vm940, %vm941
    %v943 = vsel %vm942, %v934, %v939
    %v944 = vrsqrt.pop %v874
    %v945 = vmul.f32 %v944, %v874
    %v946 = vmul.f32 %v945, %v944
    %v947 = vmul.f32 0.5, %v946
    %v948 = vsub.f32 1.5, %v947
    %v949 = vmul.f32 %v944, %v948
    %vm950 = vweird.f32 %v874
    %vm951 = vweird.f32 %v944
    %vm952 = vmor %vm950, %vm951
    %v953 = vsel %vm952, %v944, %v949
    %v954 = vrsqrt.pop %v875
    %v955 = vmul.f32 %v954, %v875
    %v956 = vmul.f32 %v955, %v954
    %v957 = vmul.f32 0.5, %v956
    %v958 = vsub.f32 1.5, %v957
    %v959 = vmul.f32 %v954, %v958
    %vm960 = vweird.f32 %v875
    %vm961 = vweird.f32 %v954
    %vm962 = vmor %vm960, %vm961
    %v963 = vsel %vm962, %v954, %v959
    %v964 = vrsqrt.pop %v876
    %v965 = vmul.f32 %v964, %v876
    %v966 = vmul.f32 %v965, %v964
    %v967 = vmul.f32 0.5, %v966
    %v968 = vsub.f32 1.5, %v967
    %v969 = vmul.f32 %v964, %v968
    %vm970 = vweird.f32 %v876
    %vm971 = vweird.f32 %v964
    %vm972 = vmor %vm970, %vm971
    %v973 = vsel %vm972, %v964, %v969
    %v974 = vrsqrt.pop %v877
    %v975 = vmul.f32 %v974, %v877
    %v976 = vmul.f32 %v975, %v974
    %v977 = vmul.f32 0.5, %v976
    %v978 = vsub.f32 1.5, %v977
    %v979 = vmul.f32 %v974, %v978
    %vm980 = vweird.f32 %v877
    %vm981 = vweird.f32 %v974
    %vm982 = vmor %vm980, %vm981
    %v983 = vsel %vm982, %v974, %v979
    %v984 = vrsqrt.pop %v878
    %v985 = vmul.f32 %v984, %v878
    %v986 = vmul.f32 %v985, %v984
    %v987 = vmul.f32 0.5, %v986
    %v988 = vsub.f32 1.5, %v987
    %v989 = vmul.f32 %v984, %v988
    %vm990 = vweird.f32 %v878
    %vm991 = vweird.f32 %v984
    %vm992 = vmor %vm990, %vm991
    %v993 = vsel %vm992, %v984, %v989
    %v994 = vrsqrt.pop %v879
    %v995 = vmul.f32 %v994, %v879
    %v996 = vmul.f32 %v995, %v994
    %v997 = vmul.f32 0.5, %v996
    %v998 = vsub.f32 1.5, %v997
    %v999 = vmul.f32 %v994, %v998
    %vm1000 = vweird.f32 %v879
    %vm1001 = vweird.f32 %v994
    %vm1002 = vmor %vm1000, %vm1001
    %v1003 = vsel %vm1002, %v994, %v999
    %v1004 = vrsqrt.pop %v880
    %v1005 = vmul.f32 %v1004, %v880
    %v1006 = vmul.f32 %v1005, %v1004
    %v1007 = vmul.f32 0.5, %v1006
    %v1008 = vsub.f32 1.5, %v1007
    %v1009 = vmul.f32 %v1004, %v1008
    %vm1010 = vweird.f32 %v880
    %vm1011 = vweird.f32 %v1004
    %vm1012 = vmor %vm1010, %vm1011
    %v1013 = vsel %vm1012, %v1004, %v1009
    %v1014 = vrsqrt.pop %v881
    %v1015 = vmul.f32 %v1014, %v881
    %v1016 = vmul.f32 %v1015, %v1014
    %v1017 = vmul.f32 0.5, %v1016
    %v1018 = vsub.f32 1.5, %v1017
    %v1019 = vmul.f32 %v1014, %v1018
    %vm1020 = vweird.f32 %v881
    %vm1021 = vweird.f32 %v1014
    %vm1022 = vmor %vm1020, %vm1021
    %v1023 = vsel %vm1022, %v1014, %v1019
    %v1024 = vrsqrt.pop %v882
    %v1025 = vmul.f32 %v1024, %v882
    %v1026 = vmul.f32 %v1025, %v1024
    %v1027 = vmul.f32 0.5, %v1026
    %v1028 = vsub.f32 1.5, %v1027
    %v1029 = vmul.f32 %v1024, %v1028
    %vm1030 = vweird.f32 %v882
    %vm1031 = vweird.f32 %v1024
    %vm1032 = vmor %vm1030, %vm1031
    %v1033 = vsel %vm1032, %v1024, %v1029
    %v1034 = vrsqrt.pop %v883
    %v1035 = vmul.f32 %v1034, %v883
    %v1036 = vmul.f32 %v1035, %v1034
    %v1037 = vmul.f32 0.5, %v1036
    %v1038 = vsub.f32 1.5, %v1037
    %v1039 = vmul.f32 %v1034, %v1038
    %vm1040 = vweird.f32 %v883
    %vm1041 = vweird.f32 %v1034
    %vm1042 = vmor %vm1040, %vm1041
    %v1043 = vsel %vm1042, %v1034, %v1039
    %v1044 = vrsqrt.pop %v884
    %v1045 = vmul.f32 %v1044, %v884
    %v1046 = vmul.f32 %v1045, %v1044
    %v1047 = vmul.f32 0.5, %v1046
    %v1048 = vsub.f32 1.5, %v1047
    %v1049 = vmul.f32 %v1044, %v1048
    %vm1050 = vweird.f32 %v884
    %vm1051 = vweird.f32 %v1044
    %vm1052 = vmor %vm1050, %vm1051
    %v1053 = vsel %vm1052, %v1044, %v1049
    %v1054 = vrsqrt.pop %v885
    %v1055 = vmul.f32 %v1054, %v885
    %v1056 = vmul.f32 %v1055, %v1054
    %v1057 = vmul.f32 0.5, %v1056
    %v1058 = vsub.f32 1.5, %v1057
    %v1059 = vmul.f32 %v1054, %v1058
    %vm1060 = vweird.f32 %v885
    %vm1061 = vweird.f32 %v1054
    %vm1062 = vmor %vm1060, %vm1061
    %v1063 = vsel %vm1062, %v1054, %v1059
    %v1064 = vrsqrt.pop %v886
    %v1065 = vmul.f32 %v1064, %v886
    %v1066 = vmul.f32 %v1065, %v1064
    %v1067 = vmul.f32 0.5, %v1066
    %v1068 = vsub.f32 1.5, %v1067
    %v1069 = vmul.f32 %v1064, %v1068
    %vm1070 = vweird.f32 %v886
    %vm1071 = vweird.f32 %v1064
    %vm1072 = vmor %vm1070, %vm1071
    %v1073 = vsel %vm1072, %v1064, %v1069
    %v1074 = vrsqrt.pop %v887
    %v1075 = vmul.f32 %v1074, %v887
    %v1076 = vmul.f32 %v1075, %v1074
    %v1077 = vmul.f32 0.5, %v1076
    %v1078 = vsub.f32 1.5, %v1077
    %v1079 = vmul.f32 %v1074, %v1078
    %vm1080 = vweird.f32 %v887
    %vm1081 = vweird.f32 %v1074
    %vm1082 = vmor %vm1080, %vm1081
    %v1083 = vsel %vm1082, %v1074, %v1079
    %v1084 = vrsqrt.pop %v888
    %v1085 = vmul.f32 %v1084, %v888
    %v1086 = vmul.f32 %v1085, %v1084
    %v1087 = vmul.f32 0.5, %v1086
    %v1088 = vsub.f32 1.5, %v1087
    %v1089 = vmul.f32 %v1084, %v1088
    %vm1090 = vweird.f32 %v888
    %vm1091 = vweird.f32 %v1084
    %vm1092 = vmor %vm1090, %vm1091
    %v1093 = vsel %vm1092, %v1084, %v1089
    %v1094 = vrsqrt.pop %v889
    %v1095 = vmul.f32 %v1094, %v889
    %v1096 = vmul.f32 %v1095, %v1094
    %v1097 = vmul.f32 0.5, %v1096
    %v1098 = vsub.f32 1.5, %v1097
    %v1099 = vmul.f32 %v1094, %v1098
    %vm1100 = vweird.f32 %v889
    %vm1101 = vweird.f32 %v1094
    %vm1102 = vmor %vm1100, %vm1101
    %v1103 = vsel %vm1102, %v1094, %v1099
    %v1104 = vrsqrt.pop %v890
    %v1105 = vmul.f32 %v1104, %v890
    %v1106 = vmul.f32 %v1105, %v1104
    %v1107 = vmul.f32 0.5, %v1106
    %v1108 = vsub.f32 1.5, %v1107
    %v1109 = vmul.f32 %v1104, %v1108
    %vm1110 = vweird.f32 %v890
    %vm1111 = vweird.f32 %v1104
    %vm1112 = vmor %vm1110, %vm1111
    %v1113 = vsel %vm1112, %v1104, %v1109
    %v1114 = vrsqrt.pop %v891
    %v1115 = vmul.f32 %v1114, %v891
    %v1116 = vmul.f32 %v1115, %v1114
    %v1117 = vmul.f32 0.5, %v1116
    %v1118 = vsub.f32 1.5, %v1117
    %v1119 = vmul.f32 %v1114, %v1118
    %vm1120 = vweird.f32 %v891
    %vm1121 = vweird.f32 %v1114
    %vm1122 = vmor %vm1120, %vm1121
    %v1123 = vsel %vm1122, %v1114, %v1119
    %v1124 = vrsqrt.pop %v892
    %v1125 = vmul.f32 %v1124, %v892
    %v1126 = vmul.f32 %v1125, %v1124
    %v1127 = vmul.f32 0.5, %v1126
    %v1128 = vsub.f32 1.5, %v1127
    %v1129 = vmul.f32 %v1124, %v1128
    %vm1130 = vweird.f32 %v892
    %vm1131 = vweird.f32 %v1124
    %vm1132 = vmor %vm1130, %vm1131
    %v1133 = vsel %vm1132, %v1124, %v1129
    %v1134 = vrsqrt.pop %v893
    %v1135 = vmul.f32 %v1134, %v893
    %v1136 = vmul.f32 %v1135, %v1134
    %v1137 = vmul.f32 0.5, %v1136
    %v1138 = vsub.f32 1.5, %v1137
    %v1139 = vmul.f32 %v1134, %v1138
    %vm1140 = vweird.f32 %v893
    %vm1141 = vweird.f32 %v1134
    %vm1142 = vmor %vm1140, %vm1141
    %v1143 = vsel %vm1142, %v1134, %v1139
    %v1144 = vld [vmem:[#allocation7] ss:$2 sm:$0xf]
    %s1145 = scalar_lea.vmem [#allocation7], 1
    %v1146 = vld [vmem:[%s1145] ss:$2 sm:$0xf]
    %v1147 = vmul.f32 %v515, %v903
    %v1148 = vmul.f32 %v516, %v903
    %v1149 = vmul.f32 %v517, %v903
    %v1150 = vmul.f32 %v518, %v903
    %v1151 = vmul.f32 %v519, %v913
    %v1152 = vmul.f32 %v520, %v913
    %v1153 = vmul.f32 %v521, %v913
    %v1154 = vmul.f32 %v522, %v913
    %v1155 = vmul.f32 %v523, %v923
    %v1156 = vmul.f32 %v524, %v923
    %v1157 = vmul.f32 %v525, %v923
    %v1158 = vmul.f32 %v526, %v923
    %v1159 = vmul.f32 %v527, %v933
    %v1160 = vmul.f32 %v528, %v933
    %v1161 = vmul.f32 %v529, %v933
    %v1162 = vmul.f32 %v530, %v933
    %v1163 = vmul.f32 %v531, %v943
    %v1164 = vmul.f32 %v532, %v943
    %v1165 = vmul.f32 %v533, %v943
    %v1166 = vmul.f32 %v534, %v943
    %v1167 = vmul.f32 %v535, %v953
    %v1168 = vmul.f32 %v536, %v953
    %v1169 = vmul.f32 %v537, %v953
    %v1170 = vmul.f32 %v538, %v953
    %v1171 = vmul.f32 %v539, %v963
    %v1172 = vmul.f32 %v540, %v963
    %v1173 = vmul.f32 %v541, %v963
    %v1174 = vmul.f32 %v542, %v963
    %v1175 = vmul.f32 %v543, %v973
    %v1176 = vmul.f32 %v544, %v973
    %v1177 = vmul.f32 %v545, %v973
    %v1178 = vmul.f32 %v546, %v973
    %v1179 = vmul.f32 %v547, %v983
    %v1180 = vmul.f32 %v548, %v983
    %v1181 = vmul.f32 %v549, %v983
    %v1182 = vmul.f32 %v550, %v983
    %v1183 = vmul.f32 %v551, %v993
    %v1184 = vmul.f32 %v552, %v993
    %v1185 = vmul.f32 %v553, %v993
    %v1186 = vmul.f32 %v554, %v993
    %v1187 = vmul.f32 %v555, %v1003
    %v1188 = vmul.f32 %v556, %v1003
    %v1189 = vmul.f32 %v557, %v1003
    %v1190 = vmul.f32 %v558, %v1003
    %v1191 = vmul.f32 %v559, %v1013
    %v1192 = vmul.f32 %v560, %v1013
    %v1193 = vmul.f32 %v561, %v1013
    %v1194 = vmul.f32 %v562, %v1013
    %v1195 = vmul.f32 %v563, %v1023
    %v1196 = vmul.f32 %v564, %v1023
    %v1197 = vmul.f32 %v565, %v1023
    %v1198 = vmul.f32 %v566, %v1023
    %v1199 = vmul.f32 %v567, %v1033
    %v1200 = vmul.f32 %v568, %v1033
    %v1201 = vmul.f32 %v569, %v1033
    %v1202 = vmul.f32 %v570, %v1033
    %v1203 = vmul.f32 %v571, %v1043
    %v1204 = vmul.f32 %v572, %v1043
    %v1205 = vmul.f32 %v573, %v1043
    %v1206 = vmul.f32 %v574, %v1043
    %v1207 = vmul.f32 %v575, %v1053
    %v1208 = vmul.f32 %v576, %v1053
    %v1209 = vmul.f32 %v577, %v1053
    %v1210 = vmul.f32 %v578, %v1053
    %v1211 = vmul.f32 %v579, %v1063
    %v1212 = vmul.f32 %v580, %v1063
    %v1213 = vmul.f32 %v581, %v1063
    %v1214 = vmul.f32 %v582, %v1063
    %v1215 = vmul.f32 %v583, %v1073
    %v1216 = vmul.f32 %v584, %v1073
    %v1217 = vmul.f32 %v585, %v1073
    %v1218 = vmul.f32 %v586, %v1073
    %v1219 = vmul.f32 %v587, %v1083
    %v1220 = vmul.f32 %v588, %v1083
    %v1221 = vmul.f32 %v589, %v1083
    %v1222 = vmul.f32 %v590, %v1083
    %v1223 = vmul.f32 %v591, %v1093
    %v1224 = vmul.f32 %v592, %v1093
    %v1225 = vmul.f32 %v593, %v1093
    %v1226 = vmul.f32 %v594, %v1093
    %v1227 = vmul.f32 %v595, %v1103
    %v1228 = vmul.f32 %v596, %v1103
    %v1229 = vmul.f32 %v597, %v1103
    %v1230 = vmul.f32 %v598, %v1103
    %v1231 = vmul.f32 %v599, %v1113
    %v1232 = vmul.f32 %v600, %v1113
    %v1233 = vmul.f32 %v601, %v1113
    %v1234 = vmul.f32 %v602, %v1113
    %v1235 = vmul.f32 %v603, %v1123
    %v1236 = vmul.f32 %v604, %v1123
    %v1237 = vmul.f32 %v605, %v1123
    %v1238 = vmul.f32 %v606, %v1123
    %v1239 = vmul.f32 %v607, %v1133
    %v1240 = vmul.f32 %v608, %v1133
    %v1241 = vmul.f32 %v609, %v1133
    %v1242 = vmul.f32 %v610, %v1133
    %v1243 = vmul.f32 %v611, %v1143
    %v1244 = vmul.f32 %v612, %v1143
    %v1245 = vmul.f32 %v613, %v1143
    %v1246 = vmul.f32 %v614, %v1143
    %v1248 = vperm.slane %v1144, 0
    %v1249 = vperm.slane %v1144, 1
    %v1250 = vperm.slane %v1144, 2
    %v1251 = vperm.slane %v1144, 3
    %v1256 = vmul.f32 %v1147, %v1248
    %v1257 = vmul.f32 %v1148, %v1249
    %v1258 = vmul.f32 %v1149, %v1250
    %v1259 = vmul.f32 %v1150, %v1251
    %v1260 = vmul.f32 %v1151, %v1248
    %v1261 = vmul.f32 %v1152, %v1249
    %v1262 = vmul.f32 %v1153, %v1250
    %v1263 = vmul.f32 %v1154, %v1251
    %v1264 = vmul.f32 %v1155, %v1248
    %v1265 = vmul.f32 %v1156, %v1249
    %v1266 = vmul.f32 %v1157, %v1250
    %v1267 = vmul.f32 %v1158, %v1251
    %v1268 = vmul.f32 %v1159, %v1248
    %v1269 = vmul.f32 %v1160, %v1249
    %v1270 = vmul.f32 %v1161, %v1250
    %v1271 = vmul.f32 %v1162, %v1251
    %v1272 = vmul.f32 %v1163, %v1248
    %v1273 = vmul.f32 %v1164, %v1249
    %v1274 = vmul.f32 %v1165, %v1250
    %v1275 = vmul.f32 %v1166, %v1251
    %v1276 = vmul.f32 %v1167, %v1248
    %v1277 = vmul.f32 %v1168, %v1249
    %v1278 = vmul.f32 %v1169, %v1250
    %v1279 = vmul.f32 %v1170, %v1251
    %v1280 = vmul.f32 %v1171, %v1248
    %v1281 = vmul.f32 %v1172, %v1249
    %v1282 = vmul.f32 %v1173, %v1250
    %v1283 = vmul.f32 %v1174, %v1251
    %v1284 = vmul.f32 %v1175, %v1248
    %v1285 = vmul.f32 %v1176, %v1249
    %v1286 = vmul.f32 %v1177, %v1250
    %v1287 = vmul.f32 %v1178, %v1251
    %v1288 = vmul.f32 %v1179, %v1248
    %v1289 = vmul.f32 %v1180, %v1249
    %v1290 = vmul.f32 %v1181, %v1250
    %v1291 = vmul.f32 %v1182, %v1251
    %v1292 = vmul.f32 %v1183, %v1248
    %v1293 = vmul.f32 %v1184, %v1249
    %v1294 = vmul.f32 %v1185, %v1250
    %v1295 = vmul.f32 %v1186, %v1251
    %v1296 = vmul.f32 %v1187, %v1248
    %v1297 = vmul.f32 %v1188, %v1249
    %v1298 = vmul.f32 %v1189, %v1250
    %v1299 = vmul.f32 %v1190, %v1251
    %v1300 = vmul.f32 %v1191, %v1248
    %v1301 = vmul.f32 %v1192, %v1249
    %v1302 = vmul.f32 %v1193, %v1250
    %v1303 = vmul.f32 %v1194, %v1251
    %v1304 = vmul.f32 %v1195, %v1248
    %v1305 = vmul.f32 %v1196, %v1249
    %v1306 = vmul.f32 %v1197, %v1250
    %v1307 = vmul.f32 %v1198, %v1251
    %v1308 = vmul.f32 %v1199, %v1248
    %v1309 = vmul.f32 %v1200, %v1249
    %v1310 = vmul.f32 %v1201, %v1250
    %v1311 = vmul.f32 %v1202, %v1251
    %v1312 = vmul.f32 %v1203, %v1248
    %v1313 = vmul.f32 %v1204, %v1249
    %v1314 = vmul.f32 %v1205, %v1250
    %v1315 = vmul.f32 %v1206, %v1251
    %v1316 = vmul.f32 %v1207, %v1248
    %v1317 = vmul.f32 %v1208, %v1249
    %v1318 = vmul.f32 %v1209, %v1250
    %v1319 = vmul.f32 %v1210, %v1251
    %v1320 = vmul.f32 %v1211, %v1248
    %v1321 = vmul.f32 %v1212, %v1249
    %v1322 = vmul.f32 %v1213, %v1250
    %v1323 = vmul.f32 %v1214, %v1251
    %v1324 = vmul.f32 %v1215, %v1248
    %v1325 = vmul.f32 %v1216, %v1249
    %v1326 = vmul.f32 %v1217, %v1250
    %v1327 = vmul.f32 %v1218, %v1251
    %v1328 = vmul.f32 %v1219, %v1248
    %v1329 = vmul.f32 %v1220, %v1249
    %v1330 = vmul.f32 %v1221, %v1250
    %v1331 = vmul.f32 %v1222, %v1251
    %v1332 = vmul.f32 %v1223, %v1248
    %v1333 = vmul.f32 %v1224, %v1249
    %v1334 = vmul.f32 %v1225, %v1250
    %v1335 = vmul.f32 %v1226, %v1251
    %v1336 = vmul.f32 %v1227, %v1248
    %v1337 = vmul.f32 %v1228, %v1249
    %v1338 = vmul.f32 %v1229, %v1250
    %v1339 = vmul.f32 %v1230, %v1251
    %v1340 = vmul.f32 %v1231, %v1248
    %v1341 = vmul.f32 %v1232, %v1249
    %v1342 = vmul.f32 %v1233, %v1250
    %v1343 = vmul.f32 %v1234, %v1251
    %v1344 = vmul.f32 %v1235, %v1248
    %v1345 = vmul.f32 %v1236, %v1249
    %v1346 = vmul.f32 %v1237, %v1250
    %v1347 = vmul.f32 %v1238, %v1251
    %v1348 = vmul.f32 %v1239, %v1248
    %v1349 = vmul.f32 %v1240, %v1249
    %v1350 = vmul.f32 %v1241, %v1250
    %v1351 = vmul.f32 %v1242, %v1251
    %v1352 = vmul.f32 %v1243, %v1248
    %v1353 = vmul.f32 %v1244, %v1249
    %v1354 = vmul.f32 %v1245, %v1250
    %v1355 = vmul.f32 %v1246, %v1251
    %v1357 = vperm.slane %v1146, 0
    %v1358 = vperm.slane %v1146, 1
    %v1359 = vperm.slane %v1146, 2
    %v1360 = vperm.slane %v1146, 3
    %v1365 = vadd.f32 %v1256, %v1357
    %v1366 = vadd.f32 %v1257, %v1358
    %v1367 = vadd.f32 %v1258, %v1359
    %v1368 = vadd.f32 %v1259, %v1360
    %v1369 = vadd.f32 %v1260, %v1357
    %v1370 = vadd.f32 %v1261, %v1358
    %v1371 = vadd.f32 %v1262, %v1359
    %v1372 = vadd.f32 %v1263, %v1360
    %v1373 = vadd.f32 %v1264, %v1357
    %v1374 = vadd.f32 %v1265, %v1358
    %v1375 = vadd.f32 %v1266, %v1359
    %v1376 = vadd.f32 %v1267, %v1360
    %v1377 = vadd.f32 %v1268, %v1357
    %v1378 = vadd.f32 %v1269, %v1358
    %v1379 = vadd.f32 %v1270, %v1359
    %v1380 = vadd.f32 %v1271, %v1360
    %v1381 = vadd.f32 %v1272, %v1357
    %v1382 = vadd.f32 %v1273, %v1358
    %v1383 = vadd.f32 %v1274, %v1359
    %v1384 = vadd.f32 %v1275, %v1360
    %v1385 = vadd.f32 %v1276, %v1357
    %v1386 = vadd.f32 %v1277, %v1358
    %v1387 = vadd.f32 %v1278, %v1359
    %v1388 = vadd.f32 %v1279, %v1360
    %v1389 = vadd.f32 %v1280, %v1357
    %v1390 = vadd.f32 %v1281, %v1358
    %v1391 = vadd.f32 %v1282, %v1359
    %v1392 = vadd.f32 %v1283, %v1360
    %v1393 = vadd.f32 %v1284, %v1357
    %v1394 = vadd.f32 %v1285, %v1358
    %v1395 = vadd.f32 %v1286, %v1359
    %v1396 = vadd.f32 %v1287, %v1360
    %v1397 = vadd.f32 %v1288, %v1357
    %v1398 = vadd.f32 %v1289, %v1358
    %v1399 = vadd.f32 %v1290, %v1359
    %v1400 = vadd.f32 %v1291, %v1360
    %v1401 = vadd.f32 %v1292, %v1357
    %v1402 = vadd.f32 %v1293, %v1358
    %v1403 = vadd.f32 %v1294, %v1359
    %v1404 = vadd.f32 %v1295, %v1360
    %v1405 = vadd.f32 %v1296, %v1357
    %v1406 = vadd.f32 %v1297, %v1358
    %v1407 = vadd.f32 %v1298, %v1359
    %v1408 = vadd.f32 %v1299, %v1360
    %v1409 = vadd.f32 %v1300, %v1357
    %v1410 = vadd.f32 %v1301, %v1358
    %v1411 = vadd.f32 %v1302, %v1359
    %v1412 = vadd.f32 %v1303, %v1360
    %v1413 = vadd.f32 %v1304, %v1357
    %v1414 = vadd.f32 %v1305, %v1358
    %v1415 = vadd.f32 %v1306, %v1359
    %v1416 = vadd.f32 %v1307, %v1360
    %v1417 = vadd.f32 %v1308, %v1357
    %v1418 = vadd.f32 %v1309, %v1358
    %v1419 = vadd.f32 %v1310, %v1359
    %v1420 = vadd.f32 %v1311, %v1360
    %v1421 = vadd.f32 %v1312, %v1357
    %v1422 = vadd.f32 %v1313, %v1358
    %v1423 = vadd.f32 %v1314, %v1359
    %v1424 = vadd.f32 %v1315, %v1360
    %v1425 = vadd.f32 %v1316, %v1357
    %v1426 = vadd.f32 %v1317, %v1358
    %v1427 = vadd.f32 %v1318, %v1359
    %v1428 = vadd.f32 %v1319, %v1360
    %v1429 = vadd.f32 %v1320, %v1357
    %v1430 = vadd.f32 %v1321, %v1358
    %v1431 = vadd.f32 %v1322, %v1359
    %v1432 = vadd.f32 %v1323, %v1360
    %v1433 = vadd.f32 %v1324, %v1357
    %v1434 = vadd.f32 %v1325, %v1358
    %v1435 = vadd.f32 %v1326, %v1359
    %v1436 = vadd.f32 %v1327, %v1360
    %v1437 = vadd.f32 %v1328, %v1357
    %v1438 = vadd.f32 %v1329, %v1358
    %v1439 = vadd.f32 %v1330, %v1359
    %v1440 = vadd.f32 %v1331, %v1360
    %v1441 = vadd.f32 %v1332, %v1357
    %v1442 = vadd.f32 %v1333, %v1358
    %v1443 = vadd.f32 %v1334, %v1359
    %v1444 = vadd.f32 %v1335, %v1360
    %v1445 = vadd.f32 %v1336, %v1357
    %v1446 = vadd.f32 %v1337, %v1358
    %v1447 = vadd.f32 %v1338, %v1359
    %v1448 = vadd.f32 %v1339, %v1360
    %v1449 = vadd.f32 %v1340, %v1357
    %v1450 = vadd.f32 %v1341, %v1358
    %v1451 = vadd.f32 %v1342, %v1359
    %v1452 = vadd.f32 %v1343, %v1360
    %v1453 = vadd.f32 %v1344, %v1357
    %v1454 = vadd.f32 %v1345, %v1358
    %v1455 = vadd.f32 %v1346, %v1359
    %v1456 = vadd.f32 %v1347, %v1360
    %v1457 = vadd.f32 %v1348, %v1357
    %v1458 = vadd.f32 %v1349, %v1358
    %v1459 = vadd.f32 %v1350, %v1359
    %v1460 = vadd.f32 %v1351, %v1360
    %v1461 = vadd.f32 %v1352, %v1357
    %v1462 = vadd.f32 %v1353, %v1358
    %v1463 = vadd.f32 %v1354, %v1359
    %v1464 = vadd.f32 %v1355, %v1360
    %1465 = vst [vmem:[#allocation8] sm:$0xff] %v1365
    %1466 = vst [vmem:[#allocation8 + $0x8] sm:$0xff] %v1366
    %1467 = vst [vmem:[#allocation8 + $0x10] sm:$0xff] %v1367
    %1468 = vst [vmem:[#allocation8 + $0x18] sm:$0xff] %v1368
    %1469 = vst [vmem:[#allocation8 + $0x20] sm:$0xff] %v1369
    %1470 = vst [vmem:[#allocation8 + $0x28] sm:$0xff] %v1370
    %1471 = vst [vmem:[#allocation8 + $0x30] sm:$0xff] %v1371
    %1472 = vst [vmem:[#allocation8 + $0x38] sm:$0xff] %v1372
    %1473 = vst [vmem:[#allocation8 + $0x40] sm:$0xff] %v1373
    %1474 = vst [vmem:[#allocation8 + $0x48] sm:$0xff] %v1374
    %1475 = vst [vmem:[#allocation8 + $0x50] sm:$0xff] %v1375
    %1476 = vst [vmem:[#allocation8 + $0x58] sm:$0xff] %v1376
    %1477 = vst [vmem:[#allocation8 + $0x60] sm:$0xff] %v1377
    %1478 = vst [vmem:[#allocation8 + $0x68] sm:$0xff] %v1378
    %1479 = vst [vmem:[#allocation8 + $0x70] sm:$0xff] %v1379
    %1480 = vst [vmem:[#allocation8 + $0x78] sm:$0xff] %v1380
    %1481 = vst [vmem:[#allocation8 + $0x80] sm:$0xff] %v1381
    %1482 = vst [vmem:[#allocation8 + $0x88] sm:$0xff] %v1382
    %1483 = vst [vmem:[#allocation8 + $0x90] sm:$0xff] %v1383
    %1484 = vst [vmem:[#allocation8 + $0x98] sm:$0xff] %v1384
    %1485 = vst [vmem:[#allocation8 + $0xa0] sm:$0xff] %v1385
    %1486 = vst [vmem:[#allocation8 + $0xa8] sm:$0xff] %v1386
    %1487 = vst [vmem:[#allocation8 + $0xb0] sm:$0xff] %v1387
    %1488 = vst [vmem:[#allocation8 + $0xb8] sm:$0xff] %v1388
    %1489 = vst [vmem:[#allocation8 + $0xc0] sm:$0xff] %v1389
    %1490 = vst [vmem:[#allocation8 + $0xc8] sm:$0xff] %v1390
    %1491 = vst [vmem:[#allocation8 + $0xd0] sm:$0xff] %v1391
    %1492 = vst [vmem:[#allocation8 + $0xd8] sm:$0xff] %v1392
    %1493 = vst [vmem:[#allocation8 + $0xe0] sm:$0xff] %v1393
    %1494 = vst [vmem:[#allocation8 + $0xe8] sm:$0xff] %v1394
    %1495 = vst [vmem:[#allocation8 + $0xf0] sm:$0xff] %v1395
    %1496 = vst [vmem:[#allocation8 + $0xf8] sm:$0xff] %v1396
    %1497 = vst [vmem:[#allocation8 + $0x100] sm:$0xff] %v1397
    %1498 = vst [vmem:[#allocation8 + $0x108] sm:$0xff] %v1398
    %1499 = vst [vmem:[#allocation8 + $0x110] sm:$0xff] %v1399
    %1500 = vst [vmem:[#allocation8 + $0x118] sm:$0xff] %v1400
    %1501 = vst [vmem:[#allocation8 + $0x120] sm:$0xff] %v1401
    %1502 = vst [vmem:[#allocation8 + $0x128] sm:$0xff] %v1402
    %1503 = vst [vmem:[#allocation8 + $0x130] sm:$0xff] %v1403
    %1504 = vst [vmem:[#allocation8 + $0x138] sm:$0xff] %v1404
    %1505 = vst [vmem:[#allocation8 + $0x140] sm:$0xff] %v1405
    %1506 = vst [vmem:[#allocation8 + $0x148] sm:$0xff] %v1406
    %1507 = vst [vmem:[#allocation8 + $0x150] sm:$0xff] %v1407
    %1508 = vst [vmem:[#allocation8 + $0x158] sm:$0xff] %v1408
    %1509 = vst [vmem:[#allocation8 + $0x160] sm:$0xff] %v1409
    %1510 = vst [vmem:[#allocation8 + $0x168] sm:$0xff] %v1410
    %1511 = vst [vmem:[#allocation8 + $0x170] sm:$0xff] %v1411
    %1512 = vst [vmem:[#allocation8 + $0x178] sm:$0xff] %v1412
    %1513 = vst [vmem:[#allocation8 + $0x180] sm:$0xff] %v1413
    %1514 = vst [vmem:[#allocation8 + $0x188] sm:$0xff] %v1414
    %1515 = vst [vmem:[#allocation8 + $0x190] sm:$0xff] %v1415
    %1516 = vst [vmem:[#allocation8 + $0x198] sm:$0xff] %v1416
    %1517 = vst [vmem:[#allocation8 + $0x1a0] sm:$0xff] %v1417
    %1518 = vst [vmem:[#allocation8 + $0x1a8] sm:$0xff] %v1418
    %1519 = vst [vmem:[#allocation8 + $0x1b0] sm:$0xff] %v1419
    %1520 = vst [vmem:[#allocation8 + $0x1b8] sm:$0xff] %v1420
    %1521 = vst [vmem:[#allocation8 + $0x1c0] sm:$0xff] %v1421
    %1522 = vst [vmem:[#allocation8 + $0x1c8] sm:$0xff] %v1422
    %1523 = vst [vmem:[#allocation8 + $0x1d0] sm:$0xff] %v1423
    %1524 = vst [vmem:[#allocation8 + $0x1d8] sm:$0xff] %v1424
    %1525 = vst [vmem:[#allocation8 + $0x1e0] sm:$0xff] %v1425
    %1526 = vst [vmem:[#allocation8 + $0x1e8] sm:$0xff] %v1426
    %1527 = vst [vmem:[#allocation8 + $0x1f0] sm:$0xff] %v1427
    %1528 = vst [vmem:[#allocation8 + $0x1f8] sm:$0xff] %v1428
    %1529 = vst [vmem:[#allocation8 + $0x200] sm:$0xff] %v1429
    %1530 = vst [vmem:[#allocation8 + $0x208] sm:$0xff] %v1430
    %1531 = vst [vmem:[#allocation8 + $0x210] sm:$0xff] %v1431
    %1532 = vst [vmem:[#allocation8 + $0x218] sm:$0xff] %v1432
    %1533 = vst [vmem:[#allocation8 + $0x220] sm:$0xff] %v1433
    %1534 = vst [vmem:[#allocation8 + $0x228] sm:$0xff] %v1434
    %1535 = vst [vmem:[#allocation8 + $0x230] sm:$0xff] %v1435
    %1536 = vst [vmem:[#allocation8 + $0x238] sm:$0xff] %v1436
    %1537 = vst [vmem:[#allocation8 + $0x240] sm:$0xff] %v1437
    %1538 = vst [vmem:[#allocation8 + $0x248] sm:$0xff] %v1438
    %1539 = vst [vmem:[#allocation8 + $0x250] sm:$0xff] %v1439
    %1540 = vst [vmem:[#allocation8 + $0x258] sm:$0xff] %v1440
    %1541 = vst [vmem:[#allocation8 + $0x260] sm:$0xff] %v1441
    %1542 = vst [vmem:[#allocation8 + $0x268] sm:$0xff] %v1442
    %1543 = vst [vmem:[#allocation8 + $0x270] sm:$0xff] %v1443
    %1544 = vst [vmem:[#allocation8 + $0x278] sm:$0xff] %v1444
    %1545 = vst [vmem:[#allocation8 + $0x280] sm:$0xff] %v1445
    %1546 = vst [vmem:[#allocation8 + $0x288] sm:$0xff] %v1446
    %1547 = vst [vmem:[#allocation8 + $0x290] sm:$0xff] %v1447
    %1548 = vst [vmem:[#allocation8 + $0x298] sm:$0xff] %v1448
    %1549 = vst [vmem:[#allocation8 + $0x2a0] sm:$0xff] %v1449
    %1550 = vst [vmem:[#allocation8 + $0x2a8] sm:$0xff] %v1450
    %1551 = vst [vmem:[#allocation8 + $0x2b0] sm:$0xff] %v1451
    %1552 = vst [vmem:[#allocation8 + $0x2b8] sm:$0xff] %v1452
    %1553 = vst [vmem:[#allocation8 + $0x2c0] sm:$0xff] %v1453
    %1554 = vst [vmem:[#allocation8 + $0x2c8] sm:$0xff] %v1454
    %1555 = vst [vmem:[#allocation8 + $0x2d0] sm:$0xff] %v1455
    %1556 = vst [vmem:[#allocation8 + $0x2d8] sm:$0xff] %v1456
    %1557 = vst [vmem:[#allocation8 + $0x2e0] sm:$0xff] %v1457
    %1558 = vst [vmem:[#allocation8 + $0x2e8] sm:$0xff] %v1458
    %1559 = vst [vmem:[#allocation8 + $0x2f0] sm:$0xff] %v1459
    %1560 = vst [vmem:[#allocation8 + $0x2f8] sm:$0xff] %v1460
    %1561 = vst [vmem:[#allocation8 + $0x300] sm:$0xf] %v1461
    %1562 = vst [vmem:[#allocation8 + $0x308] sm:$0xf] %v1462
    %1563 = vst [vmem:[#allocation8 + $0x310] sm:$0xf] %v1463
    %1564 = vst [vmem:[#allocation8 + $0x318] sm:$0xf] %v1464
    // Predicated region
    $region26: #{tpu_custom_call.1} parent=1 // pred_check
      _
    $region27: #{tpu_custom_call.1} parent=1 // pred_check_branch
      %1566 = sbr.rel (0) target = $region29
    $region28: #{tpu_custom_call.1} parent=1 // pred_region
      %1568 = vsyncadd [#allocation4], 0
      %s1569 = sshll.u32 [#allocation8], 4
      %s1570 = int_to_ptr.vmem [resolvable:$true] %s1569
      %s1571 = sshll.u32 %s3, 4
      %s1572 = int_to_ptr.hbm [resolvable:$true] %s1571
      %1577 = dma.vmem_to_hbm [thread:$0]  %s1570, 12800, %s1572, [#allocation4], 512, 512, 32
    $region29: #{tpu_custom_call.1} parent=1 // pred_fallthru
      _
    // Predicated region
    $region30: #{tpu_custom_call.1} parent=1 // pred_check
      _
    $region31: #{tpu_custom_call.1} parent=1 // pred_check_branch
      %1579 = sbr.rel (0) target = $region33
    $region32: #{tpu_custom_call.1} parent=1 // pred_region
      %1581 = dma.done [#allocation4], 12800
    $region33: #{tpu_custom_call.1} parent=1 // pred_fallthru
      _
    %1582 = vsyncpa [#allocation3], 1
    %1583 = vsyncpa [#allocation6], 1
    %1584 = vsyncpa [#allocation4], 1

</llo_original>
